<compile_context>
chip_gen: v5e
topology: v5e:2x2
jax: 0.10.0
libtpu: 0.0.40
codegen_flags: <defaults>
</compile_context>

<pallas_src>
import math
import functools

import jax
import jax.numpy as jnp
import numpy as np
from jax.experimental import pallas as pl
from jax.experimental.pallas import tpu as pltpu

RESCALE = 1.0   # matches `rescale` in the reference module (conv2.weight *= rescale)
LANE = 128      # lane width: channel dims are padded to a multiple of this
SUBLANE = 8


def _round_up(x, m):
    return ((x + m - 1) // m) * m


def _gelu(v):
    # exact (erf) GELU, same as torch.nn.functional.gelu default
    return 0.5 * v * (1.0 + jax.lax.erf(v * (1.0 / math.sqrt(2.0))))


def _resblock_kernel(xw_ref, scale_ref, shift_ref, w1_ref, b1_ref, w2_ref,
                     b2_ref, wid_ref, bid_ref, o_ref, *,
                     k, pad, hb, tl, l_real, is_initial):
    xw = xw_ref[0, 0]                                  # (TL + 2*HB, inc_p)

    # ---- shortcut: 1x1 conv on the TL central rows (one matmul) ----
    s = jnp.dot(xw[hb:hb + tl, :], wid_ref[...],
                preferred_element_type=jnp.float32) + bid_ref[...]

    # ---- main path ----
    xf = xw.astype(jnp.float32)
    h = xf if is_initial else _gelu(xf)
    h = h.astype(w1_ref.dtype)

    # conv1 ('same') on an extended row range [tile_start - pad, tile_end + pad):
    # the k taps are fused into a single MXU matmul with contraction k*inc_p.
    ext = tl + 2 * pad
    base = hb - 2 * pad
    taps1 = jnp.concatenate(
        [h[base + j: base + j + ext, :] for j in range(k)], axis=1)
    y = jnp.dot(taps1, w1_ref[...],
                preferred_element_type=jnp.float32) + b1_ref[...]

    # FiLM: y * (scale + 1) + shift  (scale+1 precomputed in the wrapper), f32
    y = y * scale_ref[0] + shift_ref[0]
    y = _gelu(y)

    # rows whose global position falls outside [0, L) are exactly conv2's
    # 'same' zero padding -> mask them before the second conv.
    pos = (jax.lax.broadcasted_iota(jnp.int32, (ext, 1), 0)
           + (pl.program_id(1) * tl - pad))
    y = jnp.where((pos >= 0) & (pos < l_real), y, 0.0)
    y = y.astype(w2_ref.dtype)

    # conv2 ('same'): one fused matmul with contraction k*midc_p
    taps2 = jnp.concatenate([y[j: j + tl, :] for j in range(k)], axis=1)
    z = jnp.dot(taps2, w2_ref[...],
                preferred_element_type=jnp.float32) + b2_ref[...]

    o_ref[0] = (z + s).astype(o_ref.dtype)


def res_block_forward(x_ncl, t, params, *, kernel_size, is_initial=False,
                      compute_dtype=jnp.float32, length_tile=None,
                      vmem_budget_bytes=24 * 1024 * 1024):
    """x_ncl: (B, inc, L) f32, t: (B, time_dim) f32. Returns (B, outc, L) f32."""
    B, inc, L = x_ncl.shape
    k = kernel_size
    assert k % 2 == 1, "use odd kernel_size so padding='same' is symmetric"
    pad = (k - 1) // 2

    w1 = params["conv1_w"]          # (midc, inc, k)
    b1 = params["conv1_b"]          # (midc,)
    w2 = params["conv2_w"]          # (outc, midc, k)
    b2 = params["conv2_b"]          # (outc,)
    wid = params["id_w"]            # (outc, inc, 1)
    bid = params["id_b"]            # (outc,)
    mw = params["mlp_w"]            # (2*midc, time_dim)
    mb = params["mlp_b"]            # (2*midc,)
    midc, outc = w1.shape[0], w2.shape[0]

    # lane-dense channel padding
    inc_p = _round_up(inc, LANE)
    midc_p = _round_up(midc, LANE)
    outc_p = _round_up(outc, LANE)

    # ---- length tile: biggest multiple of 8 that keeps the working set small
    #      enough for the default scoped-VMEM limit on every TPU generation ----
    if length_tile is None:
        bytes_per_row = 4 * (3 * inc_p + (k + 3) * midc_p + 3 * outc_p
                             + k * inc_p)
        tl = max(SUBLANE,
                 (vmem_budget_bytes // bytes_per_row) // SUBLANE * SUBLANE)
        tl = min(tl, 2048)
    else:
        tl = _round_up(length_tile, SUBLANE)
    tl = min(tl, _round_up(L, SUBLANE))
    n_l = -(-L // tl)                      # cdiv
    l_pad = n_l * tl
    hb = _round_up(2 * pad, SUBLANE)       # halo rows per side (both convs)
    win = tl + 2 * hb

    # ---- weights / biases: channels-last, lane-padded, tap-fused ----
    def pad2(a, r, c):
        return jnp.pad(a, ((0, r - a.shape[0]), (0, c - a.shape[1])))

    w1f = jnp.pad(jnp.transpose(w1, (2, 1, 0)),
                  ((0, 0), (0, inc_p - inc), (0, midc_p - midc))
                  ).reshape(k * inc_p, midc_p).astype(compute_dtype)
    w2f = jnp.pad(jnp.transpose(w2, (2, 1, 0)),
                  ((0, 0), (0, midc_p - midc), (0, outc_p - outc))
                  ).reshape(k * midc_p, outc_p).astype(compute_dtype)
    widt = pad2(jnp.transpose(wid[:, :, 0], (1, 0)),
                inc_p, outc_p).astype(compute_dtype)
    b1p = pad2(b1.reshape(1, midc), 1, midc_p)
    b2p = pad2(b2.reshape(1, outc), 1, outc_p)
    bidp = pad2(bid.reshape(1, outc), 1, outc_p)

    # ---- time-embedding MLP hoisted out of the kernel (one XLA matmul) ----
    st = t @ mw.T + mb                                   # (B, 2*midc)
    scale_p1 = pad2(st[:, :midc] + 1.0, B, midc_p).reshape(B, 1, midc_p)
    shift = pad2(st[:, midc:], B, midc_p).reshape(B, 1, midc_p)

    # ---- input: channels-last, lane-padded, padded along L, then cut into
    #      overlapping (tl + 2*hb)-row windows so each tile carries its halo.
    #      Static slices + stack (cheap copies) instead of a gather; fall back
    #      to a single take for very large tile counts to bound trace size. ----
    x = jnp.transpose(x_ncl, (0, 2, 1)).astype(compute_dtype)       # (B, L, inc)
    x = jnp.pad(x, ((0, 0), (hb, l_pad - L + hb), (0, inc_p - inc)))
    if n_l <= 512:
        xw_all = jnp.stack([x[:, l * tl: l * tl + win, :] for l in range(n_l)],
                           axis=1)                                   # (B, n_l, win, inc_p)
    else:
        idx = np.concatenate([np.arange(l * tl, l * tl + win) for l in range(n_l)])
        xw_all = jnp.take(x, jnp.asarray(idx, dtype=jnp.int32),
                          axis=1).reshape(B, n_l, win, inc_p)

    kern = functools.partial(_resblock_kernel, k=k, pad=pad, hb=hb, tl=tl,
                             l_real=L, is_initial=is_initial)

    flops = 2 * B * l_pad * (k * inc_p * midc_p + k * midc_p * outc_p
                             + inc_p * outc_p)
    bytes_accessed = 4 * B * (l_pad * (inc_p + 2 * midc_p + outc_p)
                              + k * inc_p * midc_p + k * midc_p * outc_p
                              + inc_p * outc_p)

    out = pl.pallas_call(
        kern,
        out_shape=jax.ShapeDtypeStruct((B, l_pad, outc_p), jnp.float32),
        grid_spec=pltpu.PrefetchScalarGridSpec(
            num_scalar_prefetch=0,
            grid=(B, n_l),
            in_specs=[
                pl.BlockSpec((1, 1, win, inc_p), lambda b, l: (b, l, 0, 0)),  # x windows
                pl.BlockSpec((1, 1, midc_p), lambda b, l: (b, 0, 0)),         # scale+1
                pl.BlockSpec((1, 1, midc_p), lambda b, l: (b, 0, 0)),         # shift
                pl.BlockSpec((k * inc_p, midc_p), lambda b, l: (0, 0)),       # conv1 w (fused taps)
                pl.BlockSpec((1, midc_p), lambda b, l: (0, 0)),               # conv1 b
                pl.BlockSpec((k * midc_p, outc_p), lambda b, l: (0, 0)),      # conv2 w (fused taps)
                pl.BlockSpec((1, outc_p), lambda b, l: (0, 0)),               # conv2 b
                pl.BlockSpec((inc_p, outc_p), lambda b, l: (0, 0)),           # idmapping w
                pl.BlockSpec((1, outc_p), lambda b, l: (0, 0)),               # idmapping b
            ],
            out_specs=pl.BlockSpec((1, tl, outc_p), lambda b, l: (b, l, 0)),
        ),
        compiler_params=pltpu.CompilerParams(
            dimension_semantics=("parallel", "parallel")),
        cost_estimate=pl.CostEstimate(
            flops=int(flops),
            transcendentals=int(B * l_pad * (inc_p + midc_p)),
            bytes_accessed=int(bytes_accessed)),
    )(xw_all, scale_p1, shift, w1f, b1p, w2f, b2p, widt, bidp)

    out = out[:, :L, :outc]
    return jnp.transpose(out, (0, 2, 1))                 # back to NCL


# ---------------- plain-JAX reference (for correctness check) ----------------
def ref_forward(x, t, params, *, kernel_size, is_initial=False):
    pad = (kernel_size - 1) // 2
    midc = params["conv1_w"].shape[0]

    def conv1d(v, w, b, p):
        y = jax.lax.conv_general_dilated(
            v, w, window_strides=(1,), padding=[(p, p)],
            dimension_numbers=("NCH", "OIH", "NCH"))
        return y + b[None, :, None]

    s = conv1d(x, params["id_w"], params["id_b"], 0)
    h = x if is_initial else _gelu(x)
    h = conv1d(h, params["conv1_w"], params["conv1_b"], pad)
    st = t @ params["mlp_w"].T + params["mlp_b"]          # (B, 2*midc)
    scale = st[:, :midc][:, :, None]
    shift = st[:, midc:][:, :, None]
    h = h * (scale + 1.0) + shift
    h = _gelu(h)
    h = conv1d(h, params["conv2_w"], params["conv2_b"], pad)
    return h + s


def init_params(key, inc, midc, outc, kernel_size, time_dim):
    ks = jax.random.split(key, 8)

    def uniform(k, shape, fan_in):
        bound = 1.0 / math.sqrt(fan_in)
        return jax.random.uniform(k, shape, jnp.float32, -bound, bound)

    return {
        "conv1_w": uniform(ks[0], (midc, inc, kernel_size), inc * kernel_size),
        "conv1_b": uniform(ks[1], (midc,), inc * kernel_size),
        "conv2_w": uniform(ks[2], (outc, midc, kernel_size), midc * kernel_size) * RESCALE,
        "conv2_b": uniform(ks[3], (outc,), midc * kernel_size),
        "id_w":    uniform(ks[4], (outc, inc, 1), inc),
        "id_b":    uniform(ks[5], (outc,), inc),
        "mlp_w":   uniform(ks[6], (2 * midc, time_dim), time_dim),
        "mlp_b":   uniform(ks[7], (2 * midc,), time_dim),
    }


if __name__ == "__main__":
    key = jax.random.PRNGKey(0)

    configs = [
        # single length tile
        dict(B=2, inc=4, midc=8, outc=4, L=16, k=3, time_dim=32,
             is_initial=False, length_tile=None),
        # multiple length tiles + ragged L (exercises halo + boundary masking)
        dict(B=2, inc=4, midc=8, outc=6, L=40, k=3, time_dim=32,
             is_initial=True, length_tile=16),
        # larger kernel (pad=2) with several tiles
        dict(B=2, inc=6, midc=10, outc=8, L=24, k=5, time_dim=16,
             is_initial=False, length_tile=8),
    ]

    for cfg in configs:
        kx, kt, kp, key = jax.random.split(key, 4)
        x = jax.random.normal(kx, (cfg["B"], cfg["inc"], cfg["L"]), jnp.float32)
        t = jax.random.normal(kt, (cfg["B"], cfg["time_dim"]), jnp.float32)
        params = init_params(kp, cfg["inc"], cfg["midc"], cfg["outc"],
                             cfg["k"], cfg["time_dim"])

        out = res_block_forward(x, t, params, kernel_size=cfg["k"],
                                is_initial=cfg["is_initial"],
                                length_tile=cfg["length_tile"])
        out = jax.block_until_ready(out)

        ref = ref_forward(x, t, params, kernel_size=cfg["k"],
                          is_initial=cfg["is_initial"])
        np.testing.assert_allclose(np.asarray(out), np.asarray(ref),
                                   rtol=1e-3, atol=1e-3)

    print("KERNEL_OK")
</pallas_src>

<mosaic_0001>
module attributes {stable_mosaic.version = 11 : i64} {
  func.func @_resblock_kernel(%arg0: i32, %arg1: i32, %arg2: memref<1x1x32x128xf32, #tpu.memory_space<vmem>>, %arg3: memref<1x1x128xf32, #tpu.memory_space<vmem>>, %arg4: memref<1x1x128xf32, #tpu.memory_space<vmem>>, %arg5: memref<384x128xf32, #tpu.memory_space<vmem>>, %arg6: memref<1x128xf32, #tpu.memory_space<vmem>>, %arg7: memref<384x128xf32, #tpu.memory_space<vmem>>, %arg8: memref<1x128xf32, #tpu.memory_space<vmem>>, %arg9: memref<128x128xf32, #tpu.memory_space<vmem>>, %arg10: memref<1x128xf32, #tpu.memory_space<vmem>>, %arg11: memref<1x16x128xf32, #tpu.memory_space<vmem>>) attributes {dimension_semantics = [#tpu.dimension_semantics<parallel>, #tpu.dimension_semantics<parallel>], iteration_bounds = array<i64: 2, 1>, scalar_prefetch = 0 : i64, scratch_operands = 0 : i64, tpu.core_type = #tpu.core_type<tc>, window_params = [{transform_indices = @transform_0, window_bounds = array<i64: 1, 1, 32, 128>}, {transform_indices = @transform_1, window_bounds = array<i64: 1, 1, 128>}, {transform_indices = @transform_2, window_bounds = array<i64: 1, 1, 128>}, {pipeline_mode = #tpu.pipeline_mode<synchronous>, transform_indices = @transform_3, window_bounds = array<i64: 384, 128>}, {pipeline_mode = #tpu.pipeline_mode<synchronous>, transform_indices = @transform_4, window_bounds = array<i64: 1, 128>}, {pipeline_mode = #tpu.pipeline_mode<synchronous>, transform_indices = @transform_5, window_bounds = array<i64: 384, 128>}, {pipeline_mode = #tpu.pipeline_mode<synchronous>, transform_indices = @transform_6, window_bounds = array<i64: 1, 128>}, {pipeline_mode = #tpu.pipeline_mode<synchronous>, transform_indices = @transform_7, window_bounds = array<i64: 128, 128>}, {pipeline_mode = #tpu.pipeline_mode<synchronous>, transform_indices = @transform_8, window_bounds = array<i64: 1, 128>}, {transform_indices = @transform_9, window_bounds = array<i64: 1, 16, 128>}]} {
    %c0 = arith.constant 0 : index
    %c0_0 = arith.constant 0 : index
    %c0_1 = arith.constant 0 : index
    %c0_2 = arith.constant 0 : index
    %0 = vector.load %arg2[%c0, %c0_0, %c0_1, %c0_2] : memref<1x1x32x128xf32, #tpu.memory_space<vmem>>, vector<1x1x32x128xf32>
    %1 = vector.shape_cast %0 : vector<1x1x32x128xf32> to vector<32x128xf32>
    %2 = vector.extract_strided_slice %1 {offsets = [8, 0], sizes = [16, 128], strides = [1, 1]} : vector<32x128xf32> to vector<16x128xf32>
    %c0_3 = arith.constant 0 : index
    %c0_4 = arith.constant 0 : index
    %3 = vector.load %arg9[%c0_3, %c0_4] : memref<128x128xf32, #tpu.memory_space<vmem>>, vector<128x128xf32>
    %cst = arith.constant dense<0.000000e+00> : vector<16x128xf32>
    %4 = tpu.matmul %2, %3, %cst {dimension_numbers = #tpu.dot_dimension_numbers<[1], [0], [0], [1], [0, 0, 1, 1], [], []>} : vector<16x128xf32>, vector<128x128xf32>, vector<16x128xf32> -> vector<16x128xf32>
    %c0_5 = arith.constant 0 : index
    %c0_6 = arith.constant 0 : index
    %5 = vector.load %arg10[%c0_5, %c0_6] : memref<1x128xf32, #tpu.memory_space<vmem>>, vector<1x128xf32>
    %6 = vector.broadcast %5 : vector<1x128xf32> to vector<16x128xf32>
    %7 = arith.addf %4, %6 : vector<16x128xf32>
    %cst_7 = arith.constant 5.000000e-01 : f32
    %8 = vector.broadcast %cst_7 : f32 to vector<32x128xf32>
    %9 = arith.mulf %8, %1 : vector<32x128xf32>
    %cst_8 = arith.constant 0.707106769 : f32
    %10 = vector.broadcast %cst_8 : f32 to vector<32x128xf32>
    %11 = arith.mulf %1, %10 : vector<32x128xf32>
    %12 = math.erf %11 : vector<32x128xf32>
    %cst_9 = arith.constant 1.000000e+00 : f32
    %13 = vector.broadcast %cst_9 : f32 to vector<32x128xf32>
    %14 = arith.addf %13, %12 : vector<32x128xf32>
    %15 = arith.mulf %9, %14 : vector<32x128xf32>
    %16 = vector.extract_strided_slice %15 {offsets = [6, 0], sizes = [18, 128], strides = [1, 1]} : vector<32x128xf32> to vector<18x128xf32>
    %17 = vector.extract_strided_slice %15 {offsets = [7, 0], sizes = [18, 128], strides = [1, 1]} : vector<32x128xf32> to vector<18x128xf32>
    %18 = vector.extract_strided_slice %15 {offsets = [8, 0], sizes = [18, 128], strides = [1, 1]} : vector<32x128xf32> to vector<18x128xf32>
    %19 = tpu.concatenate %16, %17, %18 in 1 : vector<18x128xf32>, vector<18x128xf32>, vector<18x128xf32> -> vector<18x384xf32>
    %c0_10 = arith.constant 0 : index
    %c0_11 = arith.constant 0 : index
    %20 = vector.load %arg5[%c0_10, %c0_11] : memref<384x128xf32, #tpu.memory_space<vmem>>, vector<384x128xf32>
    %cst_12 = arith.constant dense<0.000000e+00> : vector<18x128xf32>
    %21 = tpu.matmul %19, %20, %cst_12 {dimension_numbers = #tpu.dot_dimension_numbers<[1], [0], [0], [1], [0, 0, 1, 1], [], []>} : vector<18x384xf32>, vector<384x128xf32>, vector<18x128xf32> -> vector<18x128xf32>
    %c0_13 = arith.constant 0 : index
    %c0_14 = arith.constant 0 : index
    %22 = vector.load %arg6[%c0_13, %c0_14] : memref<1x128xf32, #tpu.memory_space<vmem>>, vector<1x128xf32>
    %23 = vector.broadcast %22 : vector<1x128xf32> to vector<18x128xf32>
    %24 = arith.addf %21, %23 : vector<18x128xf32>
    %c0_15 = arith.constant 0 : index
    %c0_16 = arith.constant 0 : index
    %c0_17 = arith.constant 0 : index
    %25 = vector.load %arg3[%c0_15, %c0_16, %c0_17] : memref<1x1x128xf32, #tpu.memory_space<vmem>>, vector<1x1x128xf32>
    %26 = vector.shape_cast %25 : vector<1x1x128xf32> to vector<1x128xf32>
    %27 = vector.broadcast %26 : vector<1x128xf32> to vector<18x128xf32>
    %28 = arith.mulf %24, %27 : vector<18x128xf32>
    %c0_18 = arith.constant 0 : index
    %c0_19 = arith.constant 0 : index
    %c0_20 = arith.constant 0 : index
    %29 = vector.load %arg4[%c0_18, %c0_19, %c0_20] : memref<1x1x128xf32, #tpu.memory_space<vmem>>, vector<1x1x128xf32>
    %30 = vector.shape_cast %29 : vector<1x1x128xf32> to vector<1x128xf32>
    %31 = vector.broadcast %30 : vector<1x128xf32> to vector<18x128xf32>
    %32 = arith.addf %28, %31 : vector<18x128xf32>
    %cst_21 = arith.constant 5.000000e-01 : f32
    %33 = vector.broadcast %cst_21 : f32 to vector<18x128xf32>
    %34 = arith.mulf %33, %32 : vector<18x128xf32>
    %cst_22 = arith.constant 0.707106769 : f32
    %35 = vector.broadcast %cst_22 : f32 to vector<18x128xf32>
    %36 = arith.mulf %32, %35 : vector<18x128xf32>
    %37 = math.erf %36 : vector<18x128xf32>
    %cst_23 = arith.constant 1.000000e+00 : f32
    %38 = vector.broadcast %cst_23 : f32 to vector<18x128xf32>
    %39 = arith.addf %38, %37 : vector<18x128xf32>
    %40 = arith.mulf %34, %39 : vector<18x128xf32>
    %41 = tpu.iota {dimensions = array<i32: 0>} : vector<18x1xi32>
    %c16_i32 = arith.constant 16 : i32
    %42 = arith.muli %arg1, %c16_i32 : i32
    %c1_i32 = arith.constant 1 : i32
    %43 = arith.subi %42, %c1_i32 : i32
    %44 = vector.broadcast %43 : i32 to vector<18x1xi32>
    %45 = arith.addi %41, %44 : vector<18x1xi32>
    %c0_i32 = arith.constant 0 : i32
    %46 = vector.broadcast %c0_i32 : i32 to vector<18x1xi32>
    %47 = arith.cmpi sge, %45, %46 : vector<18x1xi32>
    %c16_i32_24 = arith.constant 16 : i32
    %48 = vector.broadcast %c16_i32_24 : i32 to vector<18x1xi32>
    %49 = arith.cmpi slt, %45, %48 : vector<18x1xi32>
    %50 = arith.andi %47, %49 : vector<18x1xi1>
    %cst_25 = arith.constant 0.000000e+00 : f32
    %51 = vector.shape_cast %50 : vector<18x1xi1> to vector<18x1xi1>
    %52 = vector.broadcast %51 : vector<18x1xi1> to vector<18x128xi1>
    %53 = vector.broadcast %cst_25 : f32 to vector<18x128xf32>
    %54 = arith.select %52, %40, %53 : vector<18x128xi1>, vector<18x128xf32>
    %55 = vector.extract_strided_slice %54 {offsets = [0, 0], sizes = [16, 128], strides = [1, 1]} : vector<18x128xf32> to vector<16x128xf32>
    %56 = vector.extract_strided_slice %54 {offsets = [1, 0], sizes = [16, 128], strides = [1, 1]} : vector<18x128xf32> to vector<16x128xf32>
    %57 = vector.extract_strided_slice %54 {offsets = [2, 0], sizes = [16, 128], strides = [1, 1]} : vector<18x128xf32> to vector<16x128xf32>
    %58 = tpu.concatenate %55, %56, %57 in 1 : vector<16x128xf32>, vector<16x128xf32>, vector<16x128xf32> -> vector<16x384xf32>
    %c0_26 = arith.constant 0 : index
    %c0_27 = arith.constant 0 : index
    %59 = vector.load %arg7[%c0_26, %c0_27] : memref<384x128xf32, #tpu.memory_space<vmem>>, vector<384x128xf32>
    %cst_28 = arith.constant dense<0.000000e+00> : vector<16x128xf32>
    %60 = tpu.matmul %58, %59, %cst_28 {dimension_numbers = #tpu.dot_dimension_numbers<[1], [0], [0], [1], [0, 0, 1, 1], [], []>} : vector<16x384xf32>, vector<384x128xf32>, vector<16x128xf32> -> vector<16x128xf32>
    %c0_29 = arith.constant 0 : index
    %c0_30 = arith.constant 0 : index
    %61 = vector.load %arg8[%c0_29, %c0_30] : memref<1x128xf32, #tpu.memory_space<vmem>>, vector<1x128xf32>
    %62 = vector.broadcast %61 : vector<1x128xf32> to vector<16x128xf32>
    %63 = arith.addf %60, %62 : vector<16x128xf32>
    %64 = arith.addf %63, %7 : vector<16x128xf32>
    %c0_31 = arith.constant 0 : index
    %c0_32 = arith.constant 0 : index
    %c0_33 = arith.constant 0 : index
    %65 = vector.load %arg11[%c0_31, %c0_32, %c0_33] : memref<1x16x128xf32, #tpu.memory_space<vmem>>, vector<1x16x128xf32>
    %66 = vector.shape_cast %65 : vector<1x16x128xf32> to vector<16x128xf32>
    %67 = vector.shape_cast %64 : vector<16x128xf32> to vector<1x16x128xf32>
    tpu.vector_store %arg11[%c0_31, %c0_32, %c0_33], %67 {strides = array<i32>} : memref<1x16x128xf32, #tpu.memory_space<vmem>>, vector<1x16x128xf32>,
    return
  }
  func.func @transform_0(%arg0: i32, %arg1: i32) -> (i32, i32, i32, i32) {
    %c0_i32 = arith.constant 0 : i32
    %c0_i32_0 = arith.constant 0 : i32
    %c0_i32_1 = arith.constant 0 : i32
    return %arg0, %arg1, %c0_i32, %c0_i32_0 : i32, i32, i32, i32
  }
  func.func @transform_1(%arg0: i32, %arg1: i32) -> (i32, i32, i32) {
    %c0_i32 = arith.constant 0 : i32
    %c0_i32_0 = arith.constant 0 : i32
    %c0_i32_1 = arith.constant 0 : i32
    return %arg0, %c0_i32, %c0_i32_0 : i32, i32, i32
  }
  func.func @transform_2(%arg0: i32, %arg1: i32) -> (i32, i32, i32) {
    %c0_i32 = arith.constant 0 : i32
    %c0_i32_0 = arith.constant 0 : i32
    %c0_i32_1 = arith.constant 0 : i32
    return %arg0, %c0_i32, %c0_i32_0 : i32, i32, i32
  }
  func.func @transform_3(%arg0: i32, %arg1: i32) -> (i32, i32) {
    %c0_i32 = arith.constant 0 : i32
    %c0_i32_0 = arith.constant 0 : i32
    %c0_i32_1 = arith.constant 0 : i32
    return %c0_i32, %c0_i32_0 : i32, i32
  }
  func.func @transform_4(%arg0: i32, %arg1: i32) -> (i32, i32) {
    %c0_i32 = arith.constant 0 : i32
    %c0_i32_0 = arith.constant 0 : i32
    %c0_i32_1 = arith.constant 0 : i32
    return %c0_i32, %c0_i32_0 : i32, i32
  }
  func.func @transform_5(%arg0: i32, %arg1: i32) -> (i32, i32) {
    %c0_i32 = arith.constant 0 : i32
    %c0_i32_0 = arith.constant 0 : i32
    %c0_i32_1 = arith.constant 0 : i32
    return %c0_i32, %c0_i32_0 : i32, i32
  }
  func.func @transform_6(%arg0: i32, %arg1: i32) -> (i32, i32) {
    %c0_i32 = arith.constant 0 : i32
    %c0_i32_0 = arith.constant 0 : i32
    %c0_i32_1 = arith.constant 0 : i32
    return %c0_i32, %c0_i32_0 : i32, i32
  }
  func.func @transform_7(%arg0: i32, %arg1: i32) -> (i32, i32) {
    %c0_i32 = arith.constant 0 : i32
    %c0_i32_0 = arith.constant 0 : i32
    %c0_i32_1 = arith.constant 0 : i32
    return %c0_i32, %c0_i32_0 : i32, i32
  }
  func.func @transform_8(%arg0: i32, %arg1: i32) -> (i32, i32) {
    %c0_i32 = arith.constant 0 : i32
    %c0_i32_0 = arith.constant 0 : i32
    %c0_i32_1 = arith.constant 0 : i32
    return %c0_i32, %c0_i32_0 : i32, i32
  }
  func.func @transform_9(%arg0: i32, %arg1: i32) -> (i32, i32, i32) {
    %c0_i32 = arith.constant 0 : i32
    %c0_i32_0 = arith.constant 0 : i32
    return %arg0, %arg1, %c0_i32 : i32, i32, i32
  }
}

</mosaic_0001>

<llo_original>
// kernel: tpu_custom_call.1
$region0: #{tpu_custom_call.1}
  #allocation0 [shape = 'u32[]', space=smem, size = 0x4, offset = 0x4, fixed_abs, tag = 'smem constant byte address 0x4 - core index']
  #allocation1 [shape = 'u32[72,128]{1,0:T(1,128)}', space=vmem, size = 0x9000, scoped, tag = 'internal scratch']
  %s0 = inlined_call_operand.hbm [shape: f32[2,1,32,128], index: 0, kind: input, shape index: {}]
  %s1 = inlined_call_operand.hbm [shape: f32[2,1,128], index: 1, kind: input, shape index: {}]
  %s2 = inlined_call_operand.hbm [shape: f32[2,1,128], index: 2, kind: input, shape index: {}]
  %s3 = inlined_call_operand.hbm [shape: f32[384,128], index: 3, kind: input, shape index: {}]
  %s4 = inlined_call_operand.vmem [shape: f32[1,128], index: 4, kind: input, shape index: {}]
  %s5 = inlined_call_operand.hbm [shape: f32[384,128], index: 5, kind: input, shape index: {}]
  %s6 = inlined_call_operand.vmem [shape: f32[1,128], index: 6, kind: input, shape index: {}]
  %s7 = inlined_call_operand.hbm [shape: f32[128,128], index: 7, kind: input, shape index: {}]
  %s8 = inlined_call_operand.vmem [shape: f32[1,128], index: 8, kind: input, shape index: {}]
  %s9 = inlined_call_operand.hbm [shape: f32[2,16,128], index: 9, kind: output, shape index: {}]
  %s10 = sld [smem:[#allocation0]]
  $region93: #{tpu_custom_call.1} parent=0
    _
  %s12 = ssub.s32 1, %s10
  %s13 = scalar_select 0, %s12, %s10
  $region1: #{tpu_custom_call.1} parent=0
    #allocation2 [shape = 'u8[32768]{0}', space=vmem, size = 0x8000, scoped, tag = 'input window, operand 0']
    #allocation3 [shape = 's32[2]{0}', space=sflag, size = 0x8, scoped, tag = 'scoped memory for tpu_custom_call.1']
    #allocation4 [shape = 's32[2]{0}', space=sflag, size = 0x8, scoped, tag = 'scoped memory for tpu_custom_call.1']
    #allocation5 [shape = 'u8[1024]{0}', space=vmem, size = 0x400, scoped, tag = 'input window, operand 1']
    #allocation6 [shape = 's32[2]{0}', space=sflag, size = 0x8, scoped, tag = 'scoped memory for tpu_custom_call.1']
    #allocation7 [shape = 'u8[1024]{0}', space=vmem, size = 0x400, scoped, tag = 'input window, operand 2']
    #allocation8 [shape = 'u8[196608]{0}', space=vmem, size = 0x30000, scoped, tag = 'input window, operand 3, single buffered']
    #allocation9 [shape = 's32[1]{0}', space=sflag, size = 0x4, scoped, tag = 'scoped memory for tpu_custom_call.1']
    #allocation10 [shape = 'u8[196608]{0}', space=vmem, size = 0x30000, scoped, tag = 'input window, operand 5, single buffered']
    #allocation11 [shape = 'u8[65536]{0}', space=vmem, size = 0x10000, scoped, tag = 'input window, operand 7, single buffered']
    #allocation12 [shape = 's32[1]{0}', space=sflag, size = 0x4, scoped, tag = 'scoped memory for tpu_custom_call.1']
    #allocation13 [shape = 'u8[16384]{0}', space=vmem, size = 0x4000, scoped, tag = 'output window, operand 0']
    %14 = vsyncpa [#allocation3], 0
    %s15 = scalar_lea.sflag [#allocation3], 1
    %16 = vsyncpa %s15, 0
    %17 = vsyncpa [#allocation6], 0
    %s18 = scalar_lea.sflag [#allocation6], 1
    %19 = vsyncpa %s18, 0
    %20 = vsyncpa [#allocation9], 0
    %21 = vsyncpa [#allocation12], 0
    %22 = vsyncpa [#allocation4], 0
    %s23 = scalar_lea.sflag [#allocation4], 1
    %24 = vsyncpa %s23, 0
    loop: start=0, step=1, limit=4
    $region2: #{tpu_custom_call.1} parent=1 // loop_pre_header
      _
    $region3: #{tpu_custom_call.1} parent=1 // loop_header
      %s26 = sphi 0, %s30
      %p27 = scmp.ge.s32.totalorder %s26, 4
      %s33 = sphi 0, %s45
      %s34 = sphi 0, %s41
      %s35 = sphi 0, %s33
      %s36 = sphi 0, %s34
      %s37 = sphi 0, %s35
      %s38 = sphi 0, %s36
      %s50 = sphi 0, %s52
      %s53 = sphi 0, %s50
      %s54 = sphi 0, %s53
      %s70 = sphi 0, %s54
      %s76 = sphi 0, %s78
      %s79 = sphi 0, %s76
      %s80 = sphi 0, %s79
      %s96 = sphi 0, %s80
      %s102 = sphi 0, %s104
      %s105 = sphi 0, %s102
      %s106 = sphi 0, %s105
      %s122 = sphi 0, %s106
      %s126 = sphi 0, %s126
      %s128 = sphi 0, %s126
      %s129 = sphi 0, %s128
      %s143 = sphi 0, %s129
      %s147 = sphi 0, %s147
      %s149 = sphi 0, %s147
      %s150 = sphi 0, %s149
      %s164 = sphi 0, %s150
      %s168 = sphi 0, %s168
      %s170 = sphi 0, %s168
      %s171 = sphi 0, %s170
      %s185 = sphi 0, %s171
      %s189 = sphi 0, %s189
      %s191 = sphi 0, %s189
      %s192 = sphi 0, %s191
      %s206 = sphi 0, %s192
      %s210 = sphi 0, %s210
      %s212 = sphi 0, %s210
      %s213 = sphi 0, %s212
      %s227 = sphi 0, %s213
      %s231 = sphi 0, %s231
      %s233 = sphi 0, %s231
      %s234 = sphi 0, %s233
      %s248 = sphi 0, %s234
      %s256 = sphi 0, %s258
      %s259 = sphi 0, %s256
      %s260 = sphi 0, %s259
      %s276 = sphi 0, %s260
    $region4: #{tpu_custom_call.1} parent=1 // loop_header_branch
      %29 = sbr.rel (%p27) target = $region8
    $region5: #{tpu_custom_call.1} parent=1 // loop_body
      %s31 = ssub.s32 %s26, 1
      %s32 = ssub.s32 %s26, 2
      %s39 = sadd.s32 1, %s34
      %p40 = scmp.ge.s32.totalorder %s39, 1
      %s41 = scalar_select %p40, 0, %s39
      %s42 = sadd.s32 1, %s33
      %s43 = scalar_select %p40, %s42, %s33
      %p44 = scmp.ge.s32.totalorder %s43, 2
      %s45 = scalar_select %p44, 0, %s43
      %s46 = ssub.s32 %s33, %s45
      %s47 = ssub.s32 %s34, %s41
      %s48 = sor.u32 %s46, %s47
      %p49 = scmp.eq.s32.totalorder %s48, 0
      %s51 = sadd.s32 %s50, 1
      %s52 = scalar_select %p49, %s50, %s51
      %p55 = pneg %p49
      %p56 = scmp.eq.s32.totalorder %s26, 1
      %p57 = por %p55, %p56
      %p58 = scmp.ne.s32.totalorder %s50, %s53
      %p59 = scmp.eq.s32.totalorder %s26, 0
      %p60 = por %p58, %p59
      %p61 = scmp.ne.s32.totalorder %s50, %s53
      %p62 = scmp.eq.s32.totalorder %s31, 1
      %p63 = por %p61, %p62
      %p64 = scmp.ne.s32.totalorder %s53, %s54
      %p65 = scmp.eq.s32.totalorder %s31, 0
      %p66 = por %p64, %p65
      %p67 = scmp.ne.s32.totalorder %s53, %s54
      %p68 = scmp.eq.s32.totalorder %s32, 1
      %p69 = por %p67, %p68
      %p71 = scmp.ne.s32.totalorder %s54, %s70
      %p72 = scmp.eq.s32.totalorder %s32, 0
      %p73 = por %p71, %p72
      %s74 = ssub.s32 %s33, %s45
      %p75 = scmp.eq.s32.totalorder %s74, 0
      %s77 = sadd.s32 %s76, 1
      %s78 = scalar_select %p75, %s76, %s77
      %p81 = pneg %p75
      %p82 = scmp.eq.s32.totalorder %s26, 1
      %p83 = por %p81, %p82
      %p84 = scmp.ne.s32.totalorder %s76, %s79
      %p85 = scmp.eq.s32.totalorder %s26, 0
      %p86 = por %p84, %p85
      %p87 = scmp.ne.s32.totalorder %s76, %s79
      %p88 = scmp.eq.s32.totalorder %s31, 1
      %p89 = por %p87, %p88
      %p90 = scmp.ne.s32.totalorder %s79, %s80
      %p91 = scmp.eq.s32.totalorder %s31, 0
      %p92 = por %p90, %p91
      %p93 = scmp.ne.s32.totalorder %s79, %s80
      %p94 = scmp.eq.s32.totalorder %s32, 1
      %p95 = por %p93, %p94
      %p97 = scmp.ne.s32.totalorder %s80, %s96
      %p98 = scmp.eq.s32.totalorder %s32, 0
      %p99 = por %p97, %p98
      %s100 = ssub.s32 %s33, %s45
      %p101 = scmp.eq.s32.totalorder %s100, 0
      %s103 = sadd.s32 %s102, 1
      %s104 = scalar_select %p101, %s102, %s103
      %p107 = pneg %p101
      %p108 = scmp.eq.s32.totalorder %s26, 1
      %p109 = por %p107, %p108
      %p110 = scmp.ne.s32.totalorder %s102, %s105
      %p111 = scmp.eq.s32.totalorder %s26, 0
      %p112 = por %p110, %p111
      %p113 = scmp.ne.s32.totalorder %s102, %s105
      %p114 = scmp.eq.s32.totalorder %s31, 1
      %p115 = por %p113, %p114
      %p116 = scmp.ne.s32.totalorder %s105, %s106
      %p117 = scmp.eq.s32.totalorder %s31, 0
      %p118 = por %p116, %p117
      %p119 = scmp.ne.s32.totalorder %s105, %s106
      %p120 = scmp.eq.s32.totalorder %s32, 1
      %p121 = por %p119, %p120
      %p123 = scmp.ne.s32.totalorder %s106, %s122
      %p124 = scmp.eq.s32.totalorder %s32, 0
      %p125 = por %p123, %p124
      %s127 = sadd.s32 %s126, 1
      %p130 = scmp.eq.s32.totalorder %s26, 1
      %p131 = scmp.ne.s32.totalorder %s126, %s128
      %p132 = scmp.eq.s32.totalorder %s26, 0
      %p133 = por %p131, %p132
      %p134 = scmp.ne.s32.totalorder %s126, %s128
      %p135 = scmp.eq.s32.totalorder %s31, 1
      %p136 = por %p134, %p135
      %p137 = scmp.ne.s32.totalorder %s128, %s129
      %p138 = scmp.eq.s32.totalorder %s31, 0
      %p139 = por %p137, %p138
      %p140 = scmp.ne.s32.totalorder %s128, %s129
      %p141 = scmp.eq.s32.totalorder %s32, 1
      %p142 = por %p140, %p141
      %p144 = scmp.ne.s32.totalorder %s129, %s143
      %p145 = scmp.eq.s32.totalorder %s32, 0
      %p146 = por %p144, %p145
      %s148 = sadd.s32 %s147, 1
      %p151 = scmp.eq.s32.totalorder %s26, 1
      %p152 = scmp.ne.s32.totalorder %s147, %s149
      %p153 = scmp.eq.s32.totalorder %s26, 0
      %p154 = por %p152, %p153
      %p155 = scmp.ne.s32.totalorder %s147, %s149
      %p156 = scmp.eq.s32.totalorder %s31, 1
      %p157 = por %p155, %p156
      %p158 = scmp.ne.s32.totalorder %s149, %s150
      %p159 = scmp.eq.s32.totalorder %s31, 0
      %p160 = por %p158, %p159
      %p161 = scmp.ne.s32.totalorder %s149, %s150
      %p162 = scmp.eq.s32.totalorder %s32, 1
      %p163 = por %p161, %p162
      %p165 = scmp.ne.s32.totalorder %s150, %s164
      %p166 = scmp.eq.s32.totalorder %s32, 0
      %p167 = por %p165, %p166
      %s169 = sadd.s32 %s168, 1
      %p172 = scmp.eq.s32.totalorder %s26, 1
      %p173 = scmp.ne.s32.totalorder %s168, %s170
      %p174 = scmp.eq.s32.totalorder %s26, 0
      %p175 = por %p173, %p174
      %p176 = scmp.ne.s32.totalorder %s168, %s170
      %p177 = scmp.eq.s32.totalorder %s31, 1
      %p178 = por %p176, %p177
      %p179 = scmp.ne.s32.totalorder %s170, %s171
      %p180 = scmp.eq.s32.totalorder %s31, 0
      %p181 = por %p179, %p180
      %p182 = scmp.ne.s32.totalorder %s170, %s171
      %p183 = scmp.eq.s32.totalorder %s32, 1
      %p184 = por %p182, %p183
      %p186 = scmp.ne.s32.totalorder %s171, %s185
      %p187 = scmp.eq.s32.totalorder %s32, 0
      %p188 = por %p186, %p187
      %s190 = sadd.s32 %s189, 1
      %p193 = scmp.eq.s32.totalorder %s26, 1
      %p194 = scmp.ne.s32.totalorder %s189, %s191
      %p195 = scmp.eq.s32.totalorder %s26, 0
      %p196 = por %p194, %p195
      %p197 = scmp.ne.s32.totalorder %s189, %s191
      %p198 = scmp.eq.s32.totalorder %s31, 1
      %p199 = por %p197, %p198
      %p200 = scmp.ne.s32.totalorder %s191, %s192
      %p201 = scmp.eq.s32.totalorder %s31, 0
      %p202 = por %p200, %p201
      %p203 = scmp.ne.s32.totalorder %s191, %s192
      %p204 = scmp.eq.s32.totalorder %s32, 1
      %p205 = por %p203, %p204
      %p207 = scmp.ne.s32.totalorder %s192, %s206
      %p208 = scmp.eq.s32.totalorder %s32, 0
      %p209 = por %p207, %p208
      %s211 = sadd.s32 %s210, 1
      %p214 = scmp.eq.s32.totalorder %s26, 1
      %p215 = scmp.ne.s32.totalorder %s210, %s212
      %p216 = scmp.eq.s32.totalorder %s26, 0
      %p217 = por %p215, %p216
      %p218 = scmp.ne.s32.totalorder %s210, %s212
      %p219 = scmp.eq.s32.totalorder %s31, 1
      %p220 = por %p218, %p219
      %p221 = scmp.ne.s32.totalorder %s212, %s213
      %p222 = scmp.eq.s32.totalorder %s31, 0
      %p223 = por %p221, %p222
      %p224 = scmp.ne.s32.totalorder %s212, %s213
      %p225 = scmp.eq.s32.totalorder %s32, 1
      %p226 = por %p224, %p225
      %p228 = scmp.ne.s32.totalorder %s213, %s227
      %p229 = scmp.eq.s32.totalorder %s32, 0
      %p230 = por %p228, %p229
      %s232 = sadd.s32 %s231, 1
      %p235 = scmp.eq.s32.totalorder %s26, 1
      %p236 = scmp.ne.s32.totalorder %s231, %s233
      %p237 = scmp.eq.s32.totalorder %s26, 0
      %p238 = por %p236, %p237
      %p239 = scmp.ne.s32.totalorder %s231, %s233
      %p240 = scmp.eq.s32.totalorder %s31, 1
      %p241 = por %p239, %p240
      %p242 = scmp.ne.s32.totalorder %s233, %s234
      %p243 = scmp.eq.s32.totalorder %s31, 0
      %p244 = por %p242, %p243
      %p245 = scmp.ne.s32.totalorder %s233, %s234
      %p246 = scmp.eq.s32.totalorder %s32, 1
      %p247 = por %p245, %p246
      %p249 = scmp.ne.s32.totalorder %s234, %s248
      %p250 = scmp.eq.s32.totalorder %s32, 0
      %p251 = por %p249, %p250
      %s252 = ssub.s32 %s33, %s45
      %s253 = ssub.s32 %s34, %s41
      %s254 = sor.u32 %s252, %s253
      %p255 = scmp.eq.s32.totalorder %s254, 0
      %s257 = sadd.s32 %s256, 1
      %s258 = scalar_select %p255, %s256, %s257
      %p261 = pneg %p255
      %p262 = scmp.eq.s32.totalorder %s26, 1
      %p263 = por %p261, %p262
      %p264 = scmp.ne.s32.totalorder %s256, %s259
      %p265 = scmp.eq.s32.totalorder %s26, 0
      %p266 = por %p264, %p265
      %p267 = scmp.ne.s32.totalorder %s256, %s259
      %p268 = scmp.eq.s32.totalorder %s31, 1
      %p269 = por %p267, %p268
      %p270 = scmp.ne.s32.totalorder %s259, %s260
      %p271 = scmp.eq.s32.totalorder %s31, 0
      %p272 = por %p270, %p271
      %p273 = scmp.ne.s32.totalorder %s259, %s260
      %p274 = scmp.eq.s32.totalorder %s32, 1
      %p275 = por %p273, %p274
      %p277 = scmp.ne.s32.totalorder %s260, %s276
      %p278 = scmp.eq.s32.totalorder %s32, 0
      %p279 = por %p277, %p278
      %p280 = scmp.le.s32.totalorder 1, %s26
      %p281 = scmp.lt.s32.totalorder %s26, 3
      %p282 = pnand %p280, %p281
      %p283 = pneg %p282
      // Predicated region
      $region9: #{tpu_custom_call.1} parent=5 // pred_check
        _
      $region10: #{tpu_custom_call.1} parent=5 // pred_check_branch
        %285 = sbr.rel (%p282) target = $region12
      $region11: #{tpu_custom_call.1} parent=5 // pred_region
        %s286 = ssub.s32 %s26, 1
        // Predicated region
        $region13: #{tpu_custom_call.1} parent=11 // pred_check
          %p287 = pneg %p139
        $region14: #{tpu_custom_call.1} parent=11 // pred_check_branch
          %289 = sbr.rel (%p287) target = $region16
        $region15: #{tpu_custom_call.1} parent=11 // pred_region
          %291 = vsyncadd [#allocation9], 0
          %s292 = sshll.u32 %s3, 4
          %s293 = int_to_ptr.hbm [resolvable:$true] %s292
          %s294 = sshll.u32 [#allocation8], 4
          %s295 = int_to_ptr.vmem [resolvable:$true] %s294
          %300 = dma.hbm_to_vmem [thread:$0]  %s293, 6144, %s295, [#allocation9], 128, 128, 8
        $region16: #{tpu_custom_call.1} parent=11 // pred_fallthru
          _
        // Predicated region
        $region17: #{tpu_custom_call.1} parent=11 // pred_check
          %p301 = pneg %p160
        $region18: #{tpu_custom_call.1} parent=11 // pred_check_branch
          %303 = sbr.rel (%p301) target = $region20
        $region19: #{tpu_custom_call.1} parent=11 // pred_region
          _
        $region20: #{tpu_custom_call.1} parent=11 // pred_fallthru
          _
        // Predicated region
        $region21: #{tpu_custom_call.1} parent=11 // pred_check
          %p304 = pneg %p181
        $region22: #{tpu_custom_call.1} parent=11 // pred_check_branch
          %306 = sbr.rel (%p304) target = $region24
        $region23: #{tpu_custom_call.1} parent=11 // pred_region
          %308 = vsyncadd [#allocation9], 0
          %s309 = sshll.u32 %s5, 4
          %s310 = int_to_ptr.hbm [resolvable:$true] %s309
          %s311 = sshll.u32 [#allocation10], 4
          %s312 = int_to_ptr.vmem [resolvable:$true] %s311
          %317 = dma.hbm_to_vmem [thread:$0]  %s310, 6144, %s312, [#allocation9], 128, 128, 8
        $region24: #{tpu_custom_call.1} parent=11 // pred_fallthru
          _
        // Predicated region
        $region25: #{tpu_custom_call.1} parent=11 // pred_check
          %p318 = pneg %p202
        $region26: #{tpu_custom_call.1} parent=11 // pred_check_branch
          %320 = sbr.rel (%p318) target = $region28
        $region27: #{tpu_custom_call.1} parent=11 // pred_region
          _
        $region28: #{tpu_custom_call.1} parent=11 // pred_fallthru
          _
        // Predicated region
        $region29: #{tpu_custom_call.1} parent=11 // pred_check
          %p321 = pneg %p223
        $region30: #{tpu_custom_call.1} parent=11 // pred_check_branch
          %323 = sbr.rel (%p321) target = $region32
        $region31: #{tpu_custom_call.1} parent=11 // pred_region
          %325 = vsyncadd [#allocation12], 0
          %s326 = sshll.u32 %s7, 4
          %s327 = int_to_ptr.hbm [resolvable:$true] %s326
          %s328 = sshll.u32 [#allocation11], 4
          %s329 = int_to_ptr.vmem [resolvable:$true] %s328
          %334 = dma.hbm_to_vmem [thread:$0]  %s327, 2048, %s329, [#allocation12], 128, 128, 8
        $region32: #{tpu_custom_call.1} parent=11 // pred_fallthru
          _
        // Predicated region
        $region33: #{tpu_custom_call.1} parent=11 // pred_check
          %p335 = pneg %p244
        $region34: #{tpu_custom_call.1} parent=11 // pred_check_branch
          %337 = sbr.rel (%p335) target = $region36
        $region35: #{tpu_custom_call.1} parent=11 // pred_region
          _
        $region36: #{tpu_custom_call.1} parent=11 // pred_fallthru
          _
      $region12: #{tpu_custom_call.1} parent=5 // pred_fallthru
        _
      %p338 = scmp.lt.s32.totalorder %s26, 2
      // Predicated region
      $region37: #{tpu_custom_call.1} parent=5 // pred_check
        %p339 = pneg %p338
      $region38: #{tpu_custom_call.1} parent=5 // pred_check_branch
        %341 = sbr.rel (%p339) target = $region40
      $region39: #{tpu_custom_call.1} parent=5 // pred_region
        // Predicated region
        $region41: #{tpu_custom_call.1} parent=39 // pred_check
          %p342 = pneg %p60
        $region42: #{tpu_custom_call.1} parent=39 // pred_check_branch
          %344 = sbr.rel (%p342) target = $region44
        $region43: #{tpu_custom_call.1} parent=39 // pred_region
          %s345 = sand.u32 %s50, 1
          %s346 = scalar_lea.sflag [#allocation3], %s345
          %s347 = sand.u32 %s50, 1
          %s348 = smul.addr %s347, 32
          %s349 = scalar_lea.vmem [#allocation2], %s348
          %351 = vsyncadd %s346, 0
          %s352 = smul.addr %s34, 4
          %s353 = smul.addr %s33, 4
          %s354 = sadd.s32 %s352, %s353
          %s355 = smul.addr %s354, 8
          %s356 = scalar_lea.hbm %s0, %s355
          %s357 = sshll.u32 %s356, 4
          %s358 = int_to_ptr.hbm [resolvable:$true] %s357
          %s359 = sshll.u32 %s349, 4
          %s360 = int_to_ptr.vmem [resolvable:$true] %s359
          %365 = dma.hbm_to_vmem [thread:$0]  %s358, 512, %s360, %s346, 128, 128, 8
        $region44: #{tpu_custom_call.1} parent=39 // pred_fallthru
          _
        // Predicated region
        $region45: #{tpu_custom_call.1} parent=39 // pred_check
          %p366 = pneg %p86
        $region46: #{tpu_custom_call.1} parent=39 // pred_check_branch
          %368 = sbr.rel (%p366) target = $region48
        $region47: #{tpu_custom_call.1} parent=39 // pred_region
          %s369 = sand.u32 %s26, 1
          %s370 = scalar_lea.sflag [#allocation6], %s369
          %s371 = sand.u32 %s76, 1
          %s372 = scalar_lea.vmem [#allocation5], %s371
          %374 = vsyncadd %s370, 0
          %s375 = scalar_lea.hbm %s1, %s33
          %s377 = sshll.u32 %s375, 4
          %s378 = int_to_ptr.hbm [resolvable:$true] %s377
          %s379 = sshll.u32 %s372, 4
          %s380 = int_to_ptr.vmem [resolvable:$true] %s379
          %382 = dma.hbm_to_vmem [thread:$0]  %s378, 16, %s380, %s370
        $region48: #{tpu_custom_call.1} parent=39 // pred_fallthru
          _
        // Predicated region
        $region49: #{tpu_custom_call.1} parent=39 // pred_check
          %p383 = pneg %p112
        $region50: #{tpu_custom_call.1} parent=39 // pred_check_branch
          %385 = sbr.rel (%p383) target = $region52
        $region51: #{tpu_custom_call.1} parent=39 // pred_region
          %s386 = sand.u32 %s26, 1
          %s387 = scalar_lea.sflag [#allocation6], %s386
          %s388 = sand.u32 %s102, 1
          %s389 = scalar_lea.vmem [#allocation7], %s388
          %391 = vsyncadd %s387, 0
          %s392 = scalar_lea.hbm %s2, %s33
          %s394 = sshll.u32 %s392, 4
          %s395 = int_to_ptr.hbm [resolvable:$true] %s394
          %s396 = sshll.u32 %s389, 4
          %s397 = int_to_ptr.vmem [resolvable:$true] %s396
          %399 = dma.hbm_to_vmem [thread:$0]  %s395, 16, %s397, %s387
        $region52: #{tpu_custom_call.1} parent=39 // pred_fallthru
          _
      $region40: #{tpu_custom_call.1} parent=5 // pred_fallthru
        _
      %p400 = scmp.le.s32.totalorder 1, %s26
      %p401 = scmp.lt.s32.totalorder %s26, 3
      %p402 = pnand %p400, %p401
      %p403 = pneg %p402
      // Predicated region
      $region53: #{tpu_custom_call.1} parent=5 // pred_check
        _
      $region54: #{tpu_custom_call.1} parent=5 // pred_check_branch
        %405 = sbr.rel (%p402) target = $region56
      $region55: #{tpu_custom_call.1} parent=5 // pred_region
        %s406 = ssub.s32 %s26, 1
        %s407 = sand.u32 %s53, 1
        %s408 = scalar_lea.sflag [#allocation3], %s407
        %s409 = sand.u32 %s53, 1
        %s410 = smul.addr %s409, 32
        %s411 = scalar_lea.vmem [#allocation2], %s410
        // Predicated region
        $region57: #{tpu_custom_call.1} parent=55 // pred_check
          %p412 = pneg %p66
        $region58: #{tpu_custom_call.1} parent=55 // pred_check_branch
          %414 = sbr.rel (%p412) target = $region60
        $region59: #{tpu_custom_call.1} parent=55 // pred_region
          %416 = dma.done %s408, 512
        $region60: #{tpu_custom_call.1} parent=55 // pred_fallthru
          _
        %s417 = sand.u32 %s31, 1
        %s418 = scalar_lea.sflag [#allocation6], %s417
        %s419 = sand.u32 %s79, 1
        %s420 = scalar_lea.vmem [#allocation5], %s419
        // Predicated region
        $region61: #{tpu_custom_call.1} parent=55 // pred_check
          %p421 = pneg %p92
        $region62: #{tpu_custom_call.1} parent=55 // pred_check_branch
          %423 = sbr.rel (%p421) target = $region64
        $region63: #{tpu_custom_call.1} parent=55 // pred_region
          %425 = dma.done %s418, 16
        $region64: #{tpu_custom_call.1} parent=55 // pred_fallthru
          _
        %s426 = sand.u32 %s31, 1
        %s427 = scalar_lea.sflag [#allocation6], %s426
        %s428 = sand.u32 %s105, 1
        %s429 = scalar_lea.vmem [#allocation7], %s428
        // Predicated region
        $region65: #{tpu_custom_call.1} parent=55 // pred_check
          %p430 = pneg %p118
        $region66: #{tpu_custom_call.1} parent=55 // pred_check_branch
          %432 = sbr.rel (%p430) target = $region68
        $region67: #{tpu_custom_call.1} parent=55 // pred_region
          %434 = dma.done %s427, 16
        $region68: #{tpu_custom_call.1} parent=55 // pred_fallthru
          _
        // Predicated region
        $region69: #{tpu_custom_call.1} parent=55 // pred_check
          %p435 = pneg %p139
        $region70: #{tpu_custom_call.1} parent=55 // pred_check_branch
          %437 = sbr.rel (%p435) target = $region72
        $region71: #{tpu_custom_call.1} parent=55 // pred_region
          %439 = dma.done [#allocation9], 6144
        $region72: #{tpu_custom_call.1} parent=55 // pred_fallthru
          _
        // Predicated region
        $region73: #{tpu_custom_call.1} parent=55 // pred_check
          %p440 = pneg %p181
        $region74: #{tpu_custom_call.1} parent=55 // pred_check_branch
          %442 = sbr.rel (%p440) target = $region76
        $region75: #{tpu_custom_call.1} parent=55 // pred_region
          %444 = dma.done [#allocation9], 6144
        $region76: #{tpu_custom_call.1} parent=55 // pred_fallthru
          _
        // Predicated region
        $region77: #{tpu_custom_call.1} parent=55 // pred_check
          %p445 = pneg %p223
        $region78: #{tpu_custom_call.1} parent=55 // pred_check_branch
          %447 = sbr.rel (%p445) target = $region80
        $region79: #{tpu_custom_call.1} parent=55 // pred_region
          %449 = dma.done [#allocation12], 2048
        $region80: #{tpu_custom_call.1} parent=55 // pred_fallthru
          _
        %s450 = sand.u32 %s53, 1
        %s451 = scalar_lea.sflag [#allocation3], %s450
        %s452 = sand.u32 %s53, 1
        %s453 = smul.addr %s452, 32
        %s454 = scalar_lea.vmem [#allocation2], %s453
        %p455 = pneg %p66
        %p456 = pneg %p63
        %s457 = sand.u32 %s31, 1
        %s458 = scalar_lea.sflag [#allocation6], %s457
        %s459 = sand.u32 %s79, 1
        %s460 = scalar_lea.vmem [#allocation5], %s459
        %p461 = pneg %p92
        %p462 = pneg %p89
        %s463 = sand.u32 %s31, 1
        %s464 = scalar_lea.sflag [#allocation6], %s463
        %s465 = sand.u32 %s105, 1
        %s466 = scalar_lea.vmem [#allocation7], %s465
        %p467 = pneg %p118
        %p468 = pneg %p115
        %p469 = pneg %p139
        %p470 = pneg %p136
        %p471 = pneg %p160
        %p472 = pneg %p157
        %p473 = pneg %p181
        %p474 = pneg %p178
        %p475 = pneg %p202
        %p476 = pneg %p199
        %p477 = pneg %p223
        %p478 = pneg %p220
        %p479 = pneg %p244
        %p480 = pneg %p241
        %p481 = pneg %p272
        %p482 = pneg %p269
        %s483 = sand.u32 %s259, 1
        %s484 = scalar_lea.sflag [#allocation4], %s483
        %s485 = sand.u32 %s259, 1
        %s486 = smul.addr %s485, 16
        %s487 = scalar_lea.vmem [#allocation13], %s486
        %s488 = smul.u32 2, %s36
        %v489 = vld [vmem:[%s411] sm:$0xff]
        %v490 = vld [vmem:[%s411 + $0x8] sm:$0xff]
        %v491 = vld [vmem:[%s411 + $0x10] sm:$0xff]
        %v492 = vld [vmem:[%s411 + $0x18] sm:$0xff]
        %v493 = vld [vmem:[#allocation11] sm:$0xff]
        %v494 = vld [vmem:[#allocation11 + $0x8] sm:$0xff]
        %v495 = vld [vmem:[#allocation11 + $0x10] sm:$0xff]
        %v496 = vld [vmem:[#allocation11 + $0x18] sm:$0xff]
        %v497 = vld [vmem:[#allocation11 + $0x20] sm:$0xff]
        %v498 = vld [vmem:[#allocation11 + $0x28] sm:$0xff]
        %v499 = vld [vmem:[#allocation11 + $0x30] sm:$0xff]
        %v500 = vld [vmem:[#allocation11 + $0x38] sm:$0xff]
        %v501 = vld [vmem:[#allocation11 + $0x40] sm:$0xff]
        %v502 = vld [vmem:[#allocation11 + $0x48] sm:$0xff]
        %v503 = vld [vmem:[#allocation11 + $0x50] sm:$0xff]
        %v504 = vld [vmem:[#allocation11 + $0x58] sm:$0xff]
        %v505 = vld [vmem:[#allocation11 + $0x60] sm:$0xff]
        %v506 = vld [vmem:[#allocation11 + $0x68] sm:$0xff]
        %v507 = vld [vmem:[#allocation11 + $0x70] sm:$0xff]
        %v508 = vld [vmem:[#allocation11 + $0x78] sm:$0xff]
        %v509 = vld [vmem:[%s8] sm:$0x1]
        %v511 = vperm.slane %v509, 0
        %513 = vmatpush.msra.mxu0 %v508
        %514 = vmatpush.msra.mxu0 %v507
        %515 = vmatpush.msra.mxu0 %v506
        %516 = vmatpush.msra.mxu0 %v505
        %517 = vmatpush.msra.mxu0 %v504
        %518 = vmatpush.msra.mxu0 %v503
        %519 = vmatpush.msra.mxu0 %v502
        %520 = vmatpush.msra.mxu0 %v501
        %521 = vmatpush.msra.mxu0 %v500
        %522 = vmatpush.msra.mxu0 %v499
        %523 = vmatpush.msra.mxu0 %v498
        %524 = vmatpush.msra.mxu0 %v497
        %525 = vmatpush.msra.mxu0 %v496
        %526 = vmatpush.msra.mxu0 %v495
        %527 = vmatpush.msra.mxu0 %v494
        %528 = vmatpush.msra.mxu0 %v493
        %529 = vmatmul.f32.gmra.mxu0 %v490
        %v530 = vpop.f32.mrf.mxu0
        %v531 = vadd.f32 %v511, %v530
        %532 = vmatmul.f32.gmra.mxu0 %v491
        %v533 = vpop.f32.mrf.mxu0
        %v534 = vadd.f32 %v511, %v533
        %535 = vdwg.mxu0
        %v536 = vmul.f32 %v489, 0.5
        %v537 = vmul.f32 %v490, 0.5
        %v538 = vmul.f32 %v491, 0.5
        %v539 = vmul.f32 %v492, 0.5
        %v540 = vmul.f32 %v489, 0.70710677
        %v541 = vmul.f32 %v490, 0.70710677
        %v542 = vmul.f32 %v491, 0.70710677
        %v543 = vmul.f32 %v492, 0.70710677
        %v544 = vmul.f32 %v540, %v540
        %v545 = vmin.f32 16.0, %v544
        %v546 = vmul.f32 %v545, 2.1237322e-06
        %v547 = vadd.f32 %v546, 0.00028619796
        %v548 = vmul.f32 %v545, %v547
        %v549 = vadd.f32 %v548, 0.0036580483
        %v550 = vmul.f32 %v545, %v549
        %v551 = vadd.f32 %v550, 0.05243302
        %v552 = vmul.f32 %v545, %v551
        %v553 = vadd.f32 %v552, 0.18741608
        %v554 = vmul.f32 %v545, %v553
        %v555 = vadd.f32 %v554, 1.1283791
        %v556 = vmul.f32 %v540, %v555
        %v557 = vmul.f32 %v545, 3.8918573e-05
        %v558 = vadd.f32 %v557, 0.001143296
        %v559 = vmul.f32 %v545, %v558
        %v560 = vadd.f32 %v559, 0.014752088
        %v561 = vmul.f32 %v545, %v560
        %v562 = vadd.f32 %v561, 0.112945676
        %v563 = vmul.f32 %v545, %v562
        %v564 = vadd.f32 %v563, 0.4994258
        %v565 = vmul.f32 %v545, %v564
        %v566 = vadd.f32 %v565, 1.0
        %v567 = vrcp.pop %v566
        %v568 = vmul.f32 %v566, %v567
        %v569 = vsub.f32 1.0, %v568
        %v570 = vmul.f32 %v567, %v569
        %v571 = vadd.f32 %v567, %v570
        %vm572 = vweird.f32 %v566
        %vm573 = vweird.f32 %v567
        %vm574 = vmor %vm572, %vm573
        %v575 = vsel %vm574, %v567, %v571
        %v576 = vand.u32 2147483647, %v566
        %vm577 = vcmp.eq.f32.partialorder %v576, 8.507059e+37
        %v578 = vand.u32 %v566, 2147483648
        %v579 = vor.u32 1.1754944e-38, %v578
        %v580 = vsel %vm577, %v579, %v575
        %v581 = vmul.f32 %v556, %v580
        %v582 = vmin.f32 %v581, 1.0
        %v583 = vmax.f32 %v582, -1.0
        %v584 = vmul.f32 %v541, %v541
        %v585 = vmin.f32 16.0, %v584
        %v586 = vmul.f32 %v585, 2.1237322e-06
        %v587 = vadd.f32 %v586, 0.00028619796
        %v588 = vmul.f32 %v585, %v587
        %v589 = vadd.f32 %v588, 0.0036580483
        %v590 = vmul.f32 %v585, %v589
        %v591 = vadd.f32 %v590, 0.05243302
        %v592 = vmul.f32 %v585, %v591
        %v593 = vadd.f32 %v592, 0.18741608
        %v594 = vmul.f32 %v585, %v593
        %v595 = vadd.f32 %v594, 1.1283791
        %v596 = vmul.f32 %v541, %v595
        %v597 = vmul.f32 %v585, 3.8918573e-05
        %v598 = vadd.f32 %v597, 0.001143296
        %v599 = vmul.f32 %v585, %v598
        %v600 = vadd.f32 %v599, 0.014752088
        %v601 = vmul.f32 %v585, %v600
        %v602 = vadd.f32 %v601, 0.112945676
        %v603 = vmul.f32 %v585, %v602
        %v604 = vadd.f32 %v603, 0.4994258
        %v605 = vmul.f32 %v585, %v604
        %v606 = vadd.f32 %v605, 1.0
        %v607 = vrcp.pop %v606
        %v608 = vmul.f32 %v606, %v607
        %v609 = vsub.f32 1.0, %v608
        %v610 = vmul.f32 %v607, %v609
        %v611 = vadd.f32 %v607, %v610
        %vm612 = vweird.f32 %v606
        %vm613 = vweird.f32 %v607
        %vm614 = vmor %vm612, %vm613
        %v615 = vsel %vm614, %v607, %v611
        %v616 = vand.u32 2147483647, %v606
        %vm617 = vcmp.eq.f32.partialorder %v616, 8.507059e+37
        %v618 = vand.u32 %v606, 2147483648
        %v619 = vor.u32 1.1754944e-38, %v618
        %v620 = vsel %vm617, %v619, %v615
        %v621 = vmul.f32 %v596, %v620
        %v622 = vmin.f32 %v621, 1.0
        %v623 = vmax.f32 %v622, -1.0
        %v624 = vmul.f32 %v542, %v542
        %v625 = vmin.f32 16.0, %v624
        %v626 = vmul.f32 %v625, 2.1237322e-06
        %v627 = vadd.f32 %v626, 0.00028619796
        %v628 = vmul.f32 %v625, %v627
        %v629 = vadd.f32 %v628, 0.0036580483
        %v630 = vmul.f32 %v625, %v629
        %v631 = vadd.f32 %v630, 0.05243302
        %v632 = vmul.f32 %v625, %v631
        %v633 = vadd.f32 %v632, 0.18741608
        %v634 = vmul.f32 %v625, %v633
        %v635 = vadd.f32 %v634, 1.1283791
        %v636 = vmul.f32 %v542, %v635
        %v637 = vmul.f32 %v625, 3.8918573e-05
        %v638 = vadd.f32 %v637, 0.001143296
        %v639 = vmul.f32 %v625, %v638
        %v640 = vadd.f32 %v639, 0.014752088
        %v641 = vmul.f32 %v625, %v640
        %v642 = vadd.f32 %v641, 0.112945676
        %v643 = vmul.f32 %v625, %v642
        %v644 = vadd.f32 %v643, 0.4994258
        %v645 = vmul.f32 %v625, %v644
        %v646 = vadd.f32 %v645, 1.0
        %v647 = vrcp.pop %v646
        %v648 = vmul.f32 %v646, %v647
        %v649 = vsub.f32 1.0, %v648
        %v650 = vmul.f32 %v647, %v649
        %v651 = vadd.f32 %v647, %v650
        %vm652 = vweird.f32 %v646
        %vm653 = vweird.f32 %v647
        %vm654 = vmor %vm652, %vm653
        %v655 = vsel %vm654, %v647, %v651
        %v656 = vand.u32 2147483647, %v646
        %vm657 = vcmp.eq.f32.partialorder %v656, 8.507059e+37
        %v658 = vand.u32 %v646, 2147483648
        %v659 = vor.u32 1.1754944e-38, %v658
        %v660 = vsel %vm657, %v659, %v655
        %v661 = vmul.f32 %v636, %v660
        %v662 = vmin.f32 %v661, 1.0
        %v663 = vmax.f32 %v662, -1.0
        %v664 = vmul.f32 %v543, %v543
        %v665 = vmin.f32 16.0, %v664
        %v666 = vmul.f32 %v665, 2.1237322e-06
        %v667 = vadd.f32 %v666, 0.00028619796
        %v668 = vmul.f32 %v665, %v667
        %v669 = vadd.f32 %v668, 0.0036580483
        %v670 = vmul.f32 %v665, %v669
        %v671 = vadd.f32 %v670, 0.05243302
        %v672 = vmul.f32 %v665, %v671
        %v673 = vadd.f32 %v672, 0.18741608
        %v674 = vmul.f32 %v665, %v673
        %v675 = vadd.f32 %v674, 1.1283791
        %v676 = vmul.f32 %v543, %v675
        %v677 = vmul.f32 %v665, 3.8918573e-05
        %v678 = vadd.f32 %v677, 0.001143296
        %v679 = vmul.f32 %v665, %v678
        %v680 = vadd.f32 %v679, 0.014752088
        %v681 = vmul.f32 %v665, %v680
        %v682 = vadd.f32 %v681, 0.112945676
        %v683 = vmul.f32 %v665, %v682
        %v684 = vadd.f32 %v683, 0.4994258
        %v685 = vmul.f32 %v665, %v684
        %v686 = vadd.f32 %v685, 1.0
        %v687 = vrcp.pop %v686
        %v688 = vmul.f32 %v686, %v687
        %v689 = vsub.f32 1.0, %v688
        %v690 = vmul.f32 %v687, %v689
        %v691 = vadd.f32 %v687, %v690
        %vm692 = vweird.f32 %v686
        %vm693 = vweird.f32 %v687
        %vm694 = vmor %vm692, %vm693
        %v695 = vsel %vm694, %v687, %v691
        %v696 = vand.u32 2147483647, %v686
        %vm697 = vcmp.eq.f32.partialorder %v696, 8.507059e+37
        %v698 = vand.u32 %v686, 2147483648
        %v699 = vor.u32 1.1754944e-38, %v698
        %v700 = vsel %vm697, %v699, %v695
        %v701 = vmul.f32 %v676, %v700
        %v702 = vmin.f32 %v701, 1.0
        %v703 = vmax.f32 %v702, -1.0
        %v704 = vadd.f32 %v583, 1.0
        %v705 = vadd.f32 %v623, 1.0
        %v706 = vadd.f32 %v663, 1.0
        %v707 = vadd.f32 %v703, 1.0
        %v708 = vmul.f32 %v536, %v704
        %v709 = vmul.f32 %v537, %v705
        %v710 = vmul.f32 %v538, %v706
        %v711 = vmul.f32 %v539, %v707
        %vm716 = vcmask 1046528
        %v717 = vrot.slane %v708, 1
        %v718 = vrot.slane %v709, 1
        %v719 = vsel %vm716, %v717, %v718
        %v720 = vrot.slane %v710, 1
        %v721 = vsel %vm716, %v718, %v720
        %v722 = vrot.slane %v711, 1
        %v723 = vsel %vm716, %v720, %v722
        %vm724 = vcmask 1045504
        %v725 = vrot.slane %v709, 2
        %v726 = vrot.slane %v710, 2
        %v727 = vsel %vm724, %v725, %v726
        %v728 = vrot.slane %v711, 2
        %v729 = vsel %vm724, %v726, %v728
        %v730 = vld [vmem:[#allocation8] sm:$0xff]
        %v731 = vld [vmem:[#allocation8 + $0x8] sm:$0xff]
        %v732 = vld [vmem:[#allocation8 + $0x10] sm:$0xff]
        %v733 = vld [vmem:[#allocation8 + $0x18] sm:$0xff]
        %v734 = vld [vmem:[#allocation8 + $0x20] sm:$0xff]
        %v735 = vld [vmem:[#allocation8 + $0x28] sm:$0xff]
        %v736 = vld [vmem:[#allocation8 + $0x30] sm:$0xff]
        %v737 = vld [vmem:[#allocation8 + $0x38] sm:$0xff]
        %v738 = vld [vmem:[#allocation8 + $0x40] sm:$0xff]
        %v739 = vld [vmem:[#allocation8 + $0x48] sm:$0xff]
        %v740 = vld [vmem:[#allocation8 + $0x50] sm:$0xff]
        %v741 = vld [vmem:[#allocation8 + $0x58] sm:$0xff]
        %v742 = vld [vmem:[#allocation8 + $0x60] sm:$0xff]
        %v743 = vld [vmem:[#allocation8 + $0x68] sm:$0xff]
        %v744 = vld [vmem:[#allocation8 + $0x70] sm:$0xff]
        %v745 = vld [vmem:[#allocation8 + $0x78] sm:$0xff]
        %v746 = vld [vmem:[#allocation8 + $0x80] sm:$0xff]
        %v747 = vld [vmem:[#allocation8 + $0x88] sm:$0xff]
        %v748 = vld [vmem:[#allocation8 + $0x90] sm:$0xff]
        %v749 = vld [vmem:[#allocation8 + $0x98] sm:$0xff]
        %v750 = vld [vmem:[#allocation8 + $0xa0] sm:$0xff]
        %v751 = vld [vmem:[#allocation8 + $0xa8] sm:$0xff]
        %v752 = vld [vmem:[#allocation8 + $0xb0] sm:$0xff]
        %v753 = vld [vmem:[#allocation8 + $0xb8] sm:$0xff]
        %v754 = vld [vmem:[#allocation8 + $0xc0] sm:$0xff]
        %v755 = vld [vmem:[#allocation8 + $0xc8] sm:$0xff]
        %v756 = vld [vmem:[#allocation8 + $0xd0] sm:$0xff]
        %v757 = vld [vmem:[#allocation8 + $0xd8] sm:$0xff]
        %v758 = vld [vmem:[#allocation8 + $0xe0] sm:$0xff]
        %v759 = vld [vmem:[#allocation8 + $0xe8] sm:$0xff]
        %v760 = vld [vmem:[#allocation8 + $0xf0] sm:$0xff]
        %v761 = vld [vmem:[#allocation8 + $0xf8] sm:$0xff]
        %v762 = vld [vmem:[#allocation8 + $0x100] sm:$0xff]
        %v763 = vld [vmem:[#allocation8 + $0x108] sm:$0xff]
        %v764 = vld [vmem:[#allocation8 + $0x110] sm:$0xff]
        %v765 = vld [vmem:[#allocation8 + $0x118] sm:$0xff]
        %v766 = vld [vmem:[#allocation8 + $0x120] sm:$0xff]
        %v767 = vld [vmem:[#allocation8 + $0x128] sm:$0xff]
        %v768 = vld [vmem:[#allocation8 + $0x130] sm:$0xff]
        %v769 = vld [vmem:[#allocation8 + $0x138] sm:$0xff]
        %v770 = vld [vmem:[#allocation8 + $0x140] sm:$0xff]
        %v771 = vld [vmem:[#allocation8 + $0x148] sm:$0xff]
        %v772 = vld [vmem:[#allocation8 + $0x150] sm:$0xff]
        %v773 = vld [vmem:[#allocation8 + $0x158] sm:$0xff]
        %v774 = vld [vmem:[#allocation8 + $0x160] sm:$0xff]
        %v775 = vld [vmem:[#allocation8 + $0x168] sm:$0xff]
        %v776 = vld [vmem:[#allocation8 + $0x170] sm:$0xff]
        %v777 = vld [vmem:[#allocation8 + $0x178] sm:$0xff]
        %v778 = vld [vmem:[%s4] sm:$0x1]
        %v780 = vperm.slane %v778, 0
        %vm782 = vcmask 1041408
        %v783 = vrot.slane %v708, 6
        %v784 = vrot.slane %v709, 6
        %v785 = vsel %vm782, %v783, %v784
        %v786 = vrot.slane %v719, 6
        %v787 = vrot.slane %v721, 6
        %v788 = vsel %vm782, %v786, %v787
        %v789 = vrot.slane %v725, 6
        %v790 = vrot.slane %v727, 6
        %v791 = vsel %vm782, %v789, %v790
        %v792 = vrot.slane %v710, 6
        %v793 = vsel %vm782, %v784, %v792
        %v794 = vrot.slane %v723, 6
        %v795 = vsel %vm782, %v787, %v794
        %v796 = vrot.slane %v729, 6
        %v797 = vsel %vm782, %v790, %v796
        %807 = vmatpush.msra.mxu0 %v745
        %808 = vmatpush.msra.mxu0 %v744
        %809 = vmatpush.msra.mxu0 %v743
        %810 = vmatpush.msra.mxu0 %v742
        %811 = vmatpush.msra.mxu0 %v741
        %812 = vmatpush.msra.mxu0 %v740
        %813 = vmatpush.msra.mxu0 %v739
        %814 = vmatpush.msra.mxu0 %v738
        %815 = vmatpush.msra.mxu0 %v737
        %816 = vmatpush.msra.mxu0 %v736
        %817 = vmatpush.msra.mxu0 %v735
        %818 = vmatpush.msra.mxu0 %v734
        %819 = vmatpush.msra.mxu0 %v733
        %820 = vmatpush.msra.mxu0 %v732
        %821 = vmatpush.msra.mxu0 %v731
        %822 = vmatpush.msra.mxu0 %v730
        %823 = vmatmul.f32.gmra.mxu0 %v785
        %v824 = vpop.f32.mrf.mxu0
        %v825 = vadd.f32 %v780, %v824
        %826 = vmatmul.f32.gmra.mxu0 %v793
        %v827 = vpop.f32.mrf.mxu0
        %v828 = vadd.f32 %v780, %v827
        %829 = vmatmul.f32.gmra.mxu0 %v792
        %v830 = vpop.f32.mrf.mxu0
        %v831 = vadd.f32 %v780, %v830
        %832 = vdwg.mxu0
        %833 = vmatpush.msra.mxu0 %v761
        %834 = vmatpush.msra.mxu0 %v760
        %835 = vmatpush.msra.mxu0 %v759
        %836 = vmatpush.msra.mxu0 %v758
        %837 = vmatpush.msra.mxu0 %v757
        %838 = vmatpush.msra.mxu0 %v756
        %839 = vmatpush.msra.mxu0 %v755
        %840 = vmatpush.msra.mxu0 %v754
        %841 = vmatpush.msra.mxu0 %v753
        %842 = vmatpush.msra.mxu0 %v752
        %843 = vmatpush.msra.mxu0 %v751
        %844 = vmatpush.msra.mxu0 %v750
        %845 = vmatpush.msra.mxu0 %v749
        %846 = vmatpush.msra.mxu0 %v748
        %847 = vmatpush.msra.mxu0 %v747
        %848 = vmatpush.msra.mxu0 %v746
        %849 = vmatmul.f32.gmra.mxu0 %v788
        %v850 = vpop.f32.mrf.mxu0
        %v851 = vadd.f32 %v825, %v850
        %852 = vmatmul.f32.gmra.mxu0 %v795
        %v853 = vpop.f32.mrf.mxu0
        %v854 = vadd.f32 %v828, %v853
        %855 = vmatmul.f32.gmra.mxu0 %v794
        %v856 = vpop.f32.mrf.mxu0
        %v857 = vadd.f32 %v831, %v856
        %858 = vdwg.mxu0
        %859 = vmatpush.msra.mxu0 %v777
        %860 = vmatpush.msra.mxu0 %v776
        %861 = vmatpush.msra.mxu0 %v775
        %862 = vmatpush.msra.mxu0 %v774
        %863 = vmatpush.msra.mxu0 %v773
        %864 = vmatpush.msra.mxu0 %v772
        %865 = vmatpush.msra.mxu0 %v771
        %866 = vmatpush.msra.mxu0 %v770
        %867 = vmatpush.msra.mxu0 %v769
        %868 = vmatpush.msra.mxu0 %v768
        %869 = vmatpush.msra.mxu0 %v767
        %870 = vmatpush.msra.mxu0 %v766
        %871 = vmatpush.msra.mxu0 %v765
        %872 = vmatpush.msra.mxu0 %v764
        %873 = vmatpush.msra.mxu0 %v763
        %874 = vmatpush.msra.mxu0 %v762
        %875 = vmatmul.f32.gmra.mxu0 %v791
        %v876 = vpop.f32.mrf.mxu0
        %v877 = vadd.f32 %v851, %v876
        %878 = vmatmul.f32.gmra.mxu0 %v797
        %v879 = vpop.f32.mrf.mxu0
        %v880 = vadd.f32 %v854, %v879
        %881 = vmatmul.f32.gmra.mxu0 %v796
        %v882 = vpop.f32.mrf.mxu0
        %v883 = vadd.f32 %v857, %v882
        %884 = vdwg.mxu0
        %v885 = vld [vmem:[%s420] sm:$0x1]
        %v887 = vperm.slane %v885, 0
        %v889 = vmul.f32 %v877, %v887
        %v890 = vmul.f32 %v880, %v887
        %v891 = vmul.f32 %v883, %v887
        %v892 = vld [vmem:[%s429] sm:$0x1]
        %v894 = vperm.slane %v892, 0
        %v896 = vadd.f32 %v889, %v894
        %v897 = vadd.f32 %v890, %v894
        %v898 = vadd.f32 %v891, %v894
        %v899 = vmul.f32 %v896, 0.5
        %v900 = vmul.f32 %v897, 0.5
        %v901 = vmul.f32 %v898, 0.5
        %v902 = vmul.f32 %v896, 0.70710677
        %v903 = vmul.f32 %v897, 0.70710677
        %v904 = vmul.f32 %v898, 0.70710677
        %v905 = vmul.f32 %v902, %v902
        %v906 = vmin.f32 16.0, %v905
        %v907 = vmul.f32 %v906, 2.1237322e-06
        %v908 = vadd.f32 %v907, 0.00028619796
        %v909 = vmul.f32 %v906, %v908
        %v910 = vadd.f32 %v909, 0.0036580483
        %v911 = vmul.f32 %v906, %v910
        %v912 = vadd.f32 %v911, 0.05243302
        %v913 = vmul.f32 %v906, %v912
        %v914 = vadd.f32 %v913, 0.18741608
        %v915 = vmul.f32 %v906, %v914
        %v916 = vadd.f32 %v915, 1.1283791
        %v917 = vmul.f32 %v902, %v916
        %v918 = vmul.f32 %v906, 3.8918573e-05
        %v919 = vadd.f32 %v918, 0.001143296
        %v920 = vmul.f32 %v906, %v919
        %v921 = vadd.f32 %v920, 0.014752088
        %v922 = vmul.f32 %v906, %v921
        %v923 = vadd.f32 %v922, 0.112945676
        %v924 = vmul.f32 %v906, %v923
        %v925 = vadd.f32 %v924, 0.4994258
        %v926 = vmul.f32 %v906, %v925
        %v927 = vadd.f32 %v926, 1.0
        %v928 = vrcp.pop %v927
        %v929 = vmul.f32 %v927, %v928
        %v930 = vsub.f32 1.0, %v929
        %v931 = vmul.f32 %v928, %v930
        %v932 = vadd.f32 %v928, %v931
        %vm933 = vweird.f32 %v927
        %vm934 = vweird.f32 %v928
        %vm935 = vmor %vm933, %vm934
        %v936 = vsel %vm935, %v928, %v932
        %v937 = vand.u32 2147483647, %v927
        %vm938 = vcmp.eq.f32.partialorder %v937, 8.507059e+37
        %v939 = vand.u32 %v927, 2147483648
        %v940 = vor.u32 1.1754944e-38, %v939
        %v941 = vsel %vm938, %v940, %v936
        %v942 = vmul.f32 %v917, %v941
        %v943 = vmin.f32 %v942, 1.0
        %v944 = vmax.f32 %v943, -1.0
        %v945 = vmul.f32 %v903, %v903
        %v946 = vmin.f32 16.0, %v945
        %v947 = vmul.f32 %v946, 2.1237322e-06
        %v948 = vadd.f32 %v947, 0.00028619796
        %v949 = vmul.f32 %v946, %v948
        %v950 = vadd.f32 %v949, 0.0036580483
        %v951 = vmul.f32 %v946, %v950
        %v952 = vadd.f32 %v951, 0.05243302
        %v953 = vmul.f32 %v946, %v952
        %v954 = vadd.f32 %v953, 0.18741608
        %v955 = vmul.f32 %v946, %v954
        %v956 = vadd.f32 %v955, 1.1283791
        %v957 = vmul.f32 %v903, %v956
        %v958 = vmul.f32 %v946, 3.8918573e-05
        %v959 = vadd.f32 %v958, 0.001143296
        %v960 = vmul.f32 %v946, %v959
        %v961 = vadd.f32 %v960, 0.014752088
        %v962 = vmul.f32 %v946, %v961
        %v963 = vadd.f32 %v962, 0.112945676
        %v964 = vmul.f32 %v946, %v963
        %v965 = vadd.f32 %v964, 0.4994258
        %v966 = vmul.f32 %v946, %v965
        %v967 = vadd.f32 %v966, 1.0
        %v968 = vrcp.pop %v967
        %v969 = vmul.f32 %v967, %v968
        %v970 = vsub.f32 1.0, %v969
        %v971 = vmul.f32 %v968, %v970
        %v972 = vadd.f32 %v968, %v971
        %vm973 = vweird.f32 %v967
        %vm974 = vweird.f32 %v968
        %vm975 = vmor %vm973, %vm974
        %v976 = vsel %vm975, %v968, %v972
        %v977 = vand.u32 2147483647, %v967
        %vm978 = vcmp.eq.f32.partialorder %v977, 8.507059e+37
        %v979 = vand.u32 %v967, 2147483648
        %v980 = vor.u32 1.1754944e-38, %v979
        %v981 = vsel %vm978, %v980, %v976
        %v982 = vmul.f32 %v957, %v981
        %v983 = vmin.f32 %v982, 1.0
        %v984 = vmax.f32 %v983, -1.0
        %v985 = vmul.f32 %v904, %v904
        %v986 = vmin.f32 16.0, %v985
        %v987 = vmul.f32 %v986, 2.1237322e-06
        %v988 = vadd.f32 %v987, 0.00028619796
        %v989 = vmul.f32 %v986, %v988
        %v990 = vadd.f32 %v989, 0.0036580483
        %v991 = vmul.f32 %v986, %v990
        %v992 = vadd.f32 %v991, 0.05243302
        %v993 = vmul.f32 %v986, %v992
        %v994 = vadd.f32 %v993, 0.18741608
        %v995 = vmul.f32 %v986, %v994
        %v996 = vadd.f32 %v995, 1.1283791
        %v997 = vmul.f32 %v904, %v996
        %v998 = vmul.f32 %v986, 3.8918573e-05
        %v999 = vadd.f32 %v998, 0.001143296
        %v1000 = vmul.f32 %v986, %v999
        %v1001 = vadd.f32 %v1000, 0.014752088
        %v1002 = vmul.f32 %v986, %v1001
        %v1003 = vadd.f32 %v1002, 0.112945676
        %v1004 = vmul.f32 %v986, %v1003
        %v1005 = vadd.f32 %v1004, 0.4994258
        %v1006 = vmul.f32 %v986, %v1005
        %v1007 = vadd.f32 %v1006, 1.0
        %v1008 = vrcp.pop %v1007
        %v1009 = vmul.f32 %v1007, %v1008
        %v1010 = vsub.f32 1.0, %v1009
        %v1011 = vmul.f32 %v1008, %v1010
        %v1012 = vadd.f32 %v1008, %v1011
        %vm1013 = vweird.f32 %v1007
        %vm1014 = vweird.f32 %v1008
        %vm1015 = vmor %vm1013, %vm1014
        %v1016 = vsel %vm1015, %v1008, %v1012
        %v1017 = vand.u32 2147483647, %v1007
        %vm1018 = vcmp.eq.f32.partialorder %v1017, 8.507059e+37
        %v1019 = vand.u32 %v1007, 2147483648
        %v1020 = vor.u32 1.1754944e-38, %v1019
        %v1021 = vsel %vm1018, %v1020, %v1016
        %v1022 = vmul.f32 %v997, %v1021
        %v1023 = vmin.f32 %v1022, 1.0
        %v1024 = vmax.f32 %v1023, -1.0
        %v1025 = vadd.f32 %v944, 1.0
        %v1026 = vadd.f32 %v984, 1.0
        %v1027 = vadd.f32 %v1024, 1.0
        %v1028 = vmul.f32 %v899, %v1025
        %v1029 = vmul.f32 %v900, %v1026
        %v1030 = vmul.f32 %v901, %v1027
        %v1031 = vlaneseq
        %v1032 = vshrl.u32 %v1031, 7
        %v1033 = vadd.s32 %v1032, 8
        %v1034 = vadd.s32 %v1032, 16
        %s1035 = smul.u32 %s36, 16
        %s1036 = ssub.s32 %s1035, 1
        %v1037 = vstv %s1036
        %v1038 = vadd.s32 %v1032, %v1037
        %v1039 = vadd.s32 %v1033, %v1037
        %v1040 = vadd.s32 %v1034, %v1037
        %vm1041 = vcmp.ge.s32.totalorder %v1038, 0
        %vm1042 = vcmp.ge.s32.totalorder %v1039, 0
        %vm1043 = vcmp.ge.s32.totalorder %v1040, 0
        %vm1044 = vcmp.lt.s32.totalorder %v1038, 16
        %vm1045 = vcmp.lt.s32.totalorder %v1039, 16
        %vm1046 = vcmp.lt.s32.totalorder %v1040, 16
        %vm1047 = vmand %vm1041, %vm1044
        %vm1048 = vmand %vm1042, %vm1045
        %vm1049 = vmand %vm1043, %vm1046
        %v1050 = vsel %vm1047, 1, 0
        %v1051 = vsel %vm1048, 1, 0
        %v1052 = vsel %vm1049, 1, 0
        %vm1053 = vcmp.eq.s32.totalorder %v1050, 1
        %vm1054 = vcmp.eq.s32.totalorder %v1051, 1
        %vm1055 = vcmp.eq.s32.totalorder %v1052, 1
        %v1056 = vsel %vm1053, %v1028, 0.0
        %v1057 = vsel %vm1054, %v1029, 0.0
        %v1058 = vsel %vm1055, %v1030, 0.0
        %v1062 = vrot.slane %v1056, 1
        %v1063 = vrot.slane %v1057, 1
        %v1064 = vsel %vm716, %v1062, %v1063
        %v1065 = vrot.slane %v1058, 1
        %v1066 = vsel %vm716, %v1063, %v1065
        %v1069 = vrot.slane %v1056, 2
        %v1070 = vrot.slane %v1057, 2
        %v1071 = vsel %vm724, %v1069, %v1070
        %v1072 = vrot.slane %v1058, 2
        %v1073 = vsel %vm724, %v1070, %v1072
        %v1076 = vld [vmem:[#allocation10] sm:$0xff]
        %v1077 = vld [vmem:[#allocation10 + $0x8] sm:$0xff]
        %v1078 = vld [vmem:[#allocation10 + $0x10] sm:$0xff]
        %v1079 = vld [vmem:[#allocation10 + $0x18] sm:$0xff]
        %v1080 = vld [vmem:[#allocation10 + $0x20] sm:$0xff]
        %v1081 = vld [vmem:[#allocation10 + $0x28] sm:$0xff]
        %v1082 = vld [vmem:[#allocation10 + $0x30] sm:$0xff]
        %v1083 = vld [vmem:[#allocation10 + $0x38] sm:$0xff]
        %v1084 = vld [vmem:[#allocation10 + $0x40] sm:$0xff]
        %v1085 = vld [vmem:[#allocation10 + $0x48] sm:$0xff]
        %v1086 = vld [vmem:[#allocation10 + $0x50] sm:$0xff]
        %v1087 = vld [vmem:[#allocation10 + $0x58] sm:$0xff]
        %v1088 = vld [vmem:[#allocation10 + $0x60] sm:$0xff]
        %v1089 = vld [vmem:[#allocation10 + $0x68] sm:$0xff]
        %v1090 = vld [vmem:[#allocation10 + $0x70] sm:$0xff]
        %v1091 = vld [vmem:[#allocation10 + $0x78] sm:$0xff]
        %v1092 = vld [vmem:[#allocation10 + $0x80] sm:$0xff]
        %v1093 = vld [vmem:[#allocation10 + $0x88] sm:$0xff]
        %v1094 = vld [vmem:[#allocation10 + $0x90] sm:$0xff]
        %v1095 = vld [vmem:[#allocation10 + $0x98] sm:$0xff]
        %v1096 = vld [vmem:[#allocation10 + $0xa0] sm:$0xff]
        %v1097 = vld [vmem:[#allocation10 + $0xa8] sm:$0xff]
        %v1098 = vld [vmem:[#allocation10 + $0xb0] sm:$0xff]
        %v1099 = vld [vmem:[#allocation10 + $0xb8] sm:$0xff]
        %v1100 = vld [vmem:[#allocation10 + $0xc0] sm:$0xff]
        %v1101 = vld [vmem:[#allocation10 + $0xc8] sm:$0xff]
        %v1102 = vld [vmem:[#allocation10 + $0xd0] sm:$0xff]
        %v1103 = vld [vmem:[#allocation10 + $0xd8] sm:$0xff]
        %v1104 = vld [vmem:[#allocation10 + $0xe0] sm:$0xff]
        %v1105 = vld [vmem:[#allocation10 + $0xe8] sm:$0xff]
        %v1106 = vld [vmem:[#allocation10 + $0xf0] sm:$0xff]
        %v1107 = vld [vmem:[#allocation10 + $0xf8] sm:$0xff]
        %v1108 = vld [vmem:[#allocation10 + $0x100] sm:$0xff]
        %v1109 = vld [vmem:[#allocation10 + $0x108] sm:$0xff]
        %v1110 = vld [vmem:[#allocation10 + $0x110] sm:$0xff]
        %v1111 = vld [vmem:[#allocation10 + $0x118] sm:$0xff]
        %v1112 = vld [vmem:[#allocation10 + $0x120] sm:$0xff]
        %v1113 = vld [vmem:[#allocation10 + $0x128] sm:$0xff]
        %v1114 = vld [vmem:[#allocation10 + $0x130] sm:$0xff]
        %v1115 = vld [vmem:[#allocation10 + $0x138] sm:$0xff]
        %v1116 = vld [vmem:[#allocation10 + $0x140] sm:$0xff]
        %v1117 = vld [vmem:[#allocation10 + $0x148] sm:$0xff]
        %v1118 = vld [vmem:[#allocation10 + $0x150] sm:$0xff]
        %v1119 = vld [vmem:[#allocation10 + $0x158] sm:$0xff]
        %v1120 = vld [vmem:[#allocation10 + $0x160] sm:$0xff]
        %v1121 = vld [vmem:[#allocation10 + $0x168] sm:$0xff]
        %v1122 = vld [vmem:[#allocation10 + $0x170] sm:$0xff]
        %v1123 = vld [vmem:[#allocation10 + $0x178] sm:$0xff]
        %v1124 = vld [vmem:[%s6] sm:$0x1]
        %v1126 = vperm.slane %v1124, 0
        %1128 = vmatpush.msra.mxu0 %v1091
        %1129 = vmatpush.msra.mxu0 %v1090
        %1130 = vmatpush.msra.mxu0 %v1089
        %1131 = vmatpush.msra.mxu0 %v1088
        %1132 = vmatpush.msra.mxu0 %v1087
        %1133 = vmatpush.msra.mxu0 %v1086
        %1134 = vmatpush.msra.mxu0 %v1085
        %1135 = vmatpush.msra.mxu0 %v1084
        %1136 = vmatpush.msra.mxu0 %v1083
        %1137 = vmatpush.msra.mxu0 %v1082
        %1138 = vmatpush.msra.mxu0 %v1081
        %1139 = vmatpush.msra.mxu0 %v1080
        %1140 = vmatpush.msra.mxu0 %v1079
        %1141 = vmatpush.msra.mxu0 %v1078
        %1142 = vmatpush.msra.mxu0 %v1077
        %1143 = vmatpush.msra.mxu0 %v1076
        %1144 = vmatmul.f32.gmra.mxu0 %v1056
        %v1145 = vpop.f32.mrf.mxu0
        %v1146 = vadd.f32 %v1126, %v1145
        %1147 = vmatmul.f32.gmra.mxu0 %v1057
        %v1148 = vpop.f32.mrf.mxu0
        %v1149 = vadd.f32 %v1126, %v1148
        %1150 = vdwg.mxu0
        %1151 = vmatpush.msra.mxu0 %v1107
        %1152 = vmatpush.msra.mxu0 %v1106
        %1153 = vmatpush.msra.mxu0 %v1105
        %1154 = vmatpush.msra.mxu0 %v1104
        %1155 = vmatpush.msra.mxu0 %v1103
        %1156 = vmatpush.msra.mxu0 %v1102
        %1157 = vmatpush.msra.mxu0 %v1101
        %1158 = vmatpush.msra.mxu0 %v1100
        %1159 = vmatpush.msra.mxu0 %v1099
        %1160 = vmatpush.msra.mxu0 %v1098
        %1161 = vmatpush.msra.mxu0 %v1097
        %1162 = vmatpush.msra.mxu0 %v1096
        %1163 = vmatpush.msra.mxu0 %v1095
        %1164 = vmatpush.msra.mxu0 %v1094
        %1165 = vmatpush.msra.mxu0 %v1093
        %1166 = vmatpush.msra.mxu0 %v1092
        %1167 = vmatmul.f32.gmra.mxu0 %v1064
        %v1168 = vpop.f32.mrf.mxu0
        %v1169 = vadd.f32 %v1146, %v1168
        %1170 = vmatmul.f32.gmra.mxu0 %v1066
        %v1171 = vpop.f32.mrf.mxu0
        %v1172 = vadd.f32 %v1149, %v1171
        %1173 = vdwg.mxu0
        %1174 = vmatpush.msra.mxu0 %v1123
        %1175 = vmatpush.msra.mxu0 %v1122
        %1176 = vmatpush.msra.mxu0 %v1121
        %1177 = vmatpush.msra.mxu0 %v1120
        %1178 = vmatpush.msra.mxu0 %v1119
        %1179 = vmatpush.msra.mxu0 %v1118
        %1180 = vmatpush.msra.mxu0 %v1117
        %1181 = vmatpush.msra.mxu0 %v1116
        %1182 = vmatpush.msra.mxu0 %v1115
        %1183 = vmatpush.msra.mxu0 %v1114
        %1184 = vmatpush.msra.mxu0 %v1113
        %1185 = vmatpush.msra.mxu0 %v1112
        %1186 = vmatpush.msra.mxu0 %v1111
        %1187 = vmatpush.msra.mxu0 %v1110
        %1188 = vmatpush.msra.mxu0 %v1109
        %1189 = vmatpush.msra.mxu0 %v1108
        %1190 = vmatmul.f32.gmra.mxu0 %v1071
        %v1191 = vpop.f32.mrf.mxu0
        %v1192 = vadd.f32 %v1169, %v1191
        %1193 = vmatmul.f32.gmra.mxu0 %v1073
        %v1194 = vpop.f32.mrf.mxu0
        %v1195 = vadd.f32 %v1172, %v1194
        %1196 = vdwg.mxu0
        %v1197 = vadd.f32 %v1192, %v531
        %v1198 = vadd.f32 %v1195, %v534
        %1199 = vst [vmem:[%s487] sm:$0xff] %v1197
        %1200 = vst [vmem:[%s487 + $0x8] sm:$0xff] %v1198
        %s1201 = sand.u32 %s259, 1
        %s1202 = scalar_lea.sflag [#allocation4], %s1201
        %s1203 = sand.u32 %s259, 1
        %s1204 = smul.addr %s1203, 16
        %s1205 = scalar_lea.vmem [#allocation13], %s1204
        // Predicated region
        $region81: #{tpu_custom_call.1} parent=55 // pred_check
          %p1206 = pneg %p269
        $region82: #{tpu_custom_call.1} parent=55 // pred_check_branch
          %1208 = sbr.rel (%p1206) target = $region84
        $region83: #{tpu_custom_call.1} parent=55 // pred_region
          %s1209 = smul.u32 2, %s36
          %1211 = vsyncadd %s1202, 0
          %s1212 = smul.addr %s35, 2
          %s1213 = sadd.s32 %s1209, %s1212
          %s1214 = smul.addr %s1213, 8
          %s1215 = scalar_lea.hbm %s9, %s1214
          %s1216 = sshll.u32 %s1205, 4
          %s1217 = int_to_ptr.vmem [resolvable:$true] %s1216
          %s1218 = sshll.u32 %s1215, 4
          %s1219 = int_to_ptr.hbm [resolvable:$true] %s1218
          %1224 = dma.vmem_to_hbm [thread:$0]  %s1217, 256, %s1219, %s1202, 128, 128, 8
        $region84: #{tpu_custom_call.1} parent=55 // pred_fallthru
          _
      $region56: #{tpu_custom_call.1} parent=5 // pred_fallthru
        _
      %p1225 = scmp.le.s32.totalorder 2, %s26
      // Predicated region
      $region85: #{tpu_custom_call.1} parent=5 // pred_check
        %p1226 = pneg %p1225
      $region86: #{tpu_custom_call.1} parent=5 // pred_check_branch
        %1228 = sbr.rel (%p1226) target = $region88
      $region87: #{tpu_custom_call.1} parent=5 // pred_region
        %s1229 = ssub.s32 %s26, 2
        // Predicated region
        $region89: #{tpu_custom_call.1} parent=87 // pred_check
          %p1230 = pneg %p275
        $region90: #{tpu_custom_call.1} parent=87 // pred_check_branch
          %1232 = sbr.rel (%p1230) target = $region92
        $region91: #{tpu_custom_call.1} parent=87 // pred_region
          %s1233 = sand.u32 %s260, 1
          %s1234 = scalar_lea.sflag [#allocation4], %s1233
          %s1235 = sand.u32 %s260, 1
          %s1236 = smul.addr %s1235, 16
          %s1237 = scalar_lea.vmem [#allocation13], %s1236
          %1239 = dma.done %s1234, 256
        $region92: #{tpu_custom_call.1} parent=87 // pred_fallthru
          _
      $region88: #{tpu_custom_call.1} parent=5 // pred_fallthru
        _
    $region6: #{tpu_custom_call.1} parent=1 // loop_footer
      %s30 = sadd.s32 1, %s26
    $region7: #{tpu_custom_call.1} parent=1 // loop_footer_branch
      %25 = sbr.rel target = $region3
    $region8: #{tpu_custom_call.1} parent=1 // loop_exit
      _
    %1240 = vsyncpa [#allocation3], 1
    %s1241 = scalar_lea.sflag [#allocation3], 1
    %1242 = vsyncpa %s1241, 1
    %1243 = vsyncpa [#allocation6], 1
    %s1244 = scalar_lea.sflag [#allocation6], 1
    %1245 = vsyncpa %s1244, 1
    %1246 = vsyncpa [#allocation9], 1
    %1247 = vsyncpa [#allocation12], 1
    %1248 = vsyncpa [#allocation4], 1
    %s1249 = scalar_lea.sflag [#allocation4], 1
    %1250 = vsyncpa %s1249, 1

</llo_original>
